<compile_context>
chip_gen: v5e
topology: v5e:2x2
jax: 0.10.0
libtpu: 0.0.40
codegen_flags: <defaults>
</compile_context>

<pallas_src>
import math

import jax
import jax.numpy as jnp
from jax.experimental import pallas as pl
from jax.experimental.pallas import tpu as pltpu

K = 7          # conv kernel size
P = K // 2     # padding

_HEADROOM_BYTES = 6 << 20   # Mosaic internals, conv intermediates, small scratch


# ---------------------------------------------------------------------------
# Generation-aware VMEM budgeting
# ---------------------------------------------------------------------------
def _tpu_vmem_capacity_bytes():
    """Physical VMEM per TensorCore (trace-time query; conservative fallback)."""
    try:
        return int(pltpu.get_tpu_info().vmem_capacity_bytes)
    except Exception:
        return 64 << 20   # v7x-sized conservative default


def _scoped_vmem_cap(phys_bytes):
    # v5e/v6e: 128 MiB physical -> raise the scoped limit to ~96 MiB
    # v7x:      64 MiB physical -> ~48 MiB, leaving room for Mosaic internals
    if phys_bytes >= (100 << 20):
        return 96 << 20
    return 48 << 20


def _pick_c_block(budget_bytes, per_channel_bytes, C):
    """Largest sublane-aligned channel tile whose pipelined buffers fit the budget."""
    cb = budget_bytes // max(per_channel_bytes, 1)
    if cb >= C:
        return C
    cb8 = (cb // 8) * 8
    if cb8 >= 8:
        return int(cb8)
    return int(min(C, 8))   # keep sublane alignment even under a very tight budget


# ---------------------------------------------------------------------------
# Small in-kernel layout helpers (tiny maps only; explicit slices + concat so we
# do not depend on general in-kernel reshape lowering).
# ---------------------------------------------------------------------------
def _rows_from_flat(flat, H, W):
    # (1, H*W) -> (H, W): H static lane-offset slices concatenated along sublanes.
    return jnp.concatenate([flat[:, h * W:(h + 1) * W] for h in range(H)], axis=0)


def _flat_from_rows(rows, H, W):
    # (H, W) -> (1, H*W): H sublane slices concatenated along lanes.
    return jnp.concatenate([rows[h:h + 1, :] for h in range(H)], axis=1)


def _conv7x7_sigmoid(avg2d, mx2d, w_ref, H, W):
    """'Same' 7x7 conv over the stacked (avg, max) maps + sigmoid -> (H, W) f32 gate."""
    # Zero-padded maps, built ONCE (mirrors the conv's zero padding, not a max-pool pad).
    avg_p = jnp.pad(avg2d, ((P, P), (P, P)))
    mx_p = jnp.pad(mx2d, ((P, P), (P, P)))
    # Hoist all 2*K*K scalar weight reads (SMEM) out of the unrolled tap loop.
    w_avg = [[w_ref[0 * K * K + ki * K + kj] for kj in range(K)] for ki in range(K)]
    w_max = [[w_ref[1 * K * K + ki * K + kj] for kj in range(K)] for ki in range(K)]
    # kj-outer / ki-inner: one lane(W)-axis shift per kj per map (K relayouts per map
    # total), and only the two *current* shifted slices stay live.  Working set is
    # 2 padded maps + 2 slices + 4 accumulators -> no vreg spills at larger H, W.
    acc = [jnp.zeros((H, W), jnp.float32) for _ in range(4)]
    t = 0
    for kj in range(K):
        avg_c = avg_p[:, kj:kj + W]                      # (H + 2P, W)
        mx_c = mx_p[:, kj:kj + W]
        for ki in range(K):
            tap = (w_avg[ki][kj] * avg_c[ki:ki + H, :]
                   + w_max[ki][kj] * mx_c[ki:ki + H, :])
            acc[t % 4] = acc[t % 4] + tap
            t += 1
    conv = (acc[0] + acc[1]) + (acc[2] + acc[3])
    return jax.nn.sigmoid(conv)


# ---------------------------------------------------------------------------
# Kernels
# ---------------------------------------------------------------------------
def _make_fused_kernel(C, H, W):
    """Single pass: one read + one write of x per batch element (x stays in its dtype)."""
    inv_c = 1.0 / C

    def kernel(x_ref, w_ref, o_ref):
        x = x_ref[0]                                               # (C, H*W), native dtype
        avg_flat = jnp.sum(x.astype(jnp.float32), axis=0, keepdims=True) * inv_c
        max_flat = jnp.max(x, axis=0, keepdims=True).astype(jnp.float32)
        attn2d = _conv7x7_sigmoid(_rows_from_flat(avg_flat, H, W),
                                  _rows_from_flat(max_flat, H, W),
                                  w_ref, H, W)
        gate = _flat_from_rows(attn2d, H, W)                       # (1, H*W), f32
        # Lane-dense gated store in the streaming dtype: (C, H*W) * (1, H*W).
        o_ref[0] = x * gate.astype(x_ref.dtype)

    return kernel


def _make_attn_map_kernel(C, H, W, c_blk):
    """Pass 1 of the channel-tiled path: per-batch attention map.

    Grid = (N, C_tiles); C is the trailing "arbitrary" reduction axis with running
    f32 sum / max kept in VMEM scratch; conv + sigmoid run once at the last C tile.
    Non-dividing tiles are handled with a statically-gated channel mask.
    """
    inv_c = 1.0 / C
    has_tail = (C % c_blk) != 0

    def kernel(x_ref, w_ref, attn_ref, sum_sc, max_sc):
        c = pl.program_id(1)

        @pl.when(c == 0)
        def _init():
            sum_sc[...] = jnp.zeros_like(sum_sc)
            max_sc[...] = jnp.full_like(max_sc, -jnp.inf)

        x = x_ref[0].astype(jnp.float32)                           # (c_blk, H*W)
        if has_tail:
            ch = c * c_blk + jax.lax.broadcasted_iota(jnp.int32, (c_blk, 1), 0)
            valid = ch < C
            x_sum = jnp.where(valid, x, 0.0)
            x_max = jnp.where(valid, x, -jnp.inf)
        else:
            x_sum = x
            x_max = x
        sum_sc[...] += jnp.sum(x_sum, axis=0, keepdims=True)
        max_sc[...] = jnp.maximum(max_sc[...], jnp.max(x_max, axis=0, keepdims=True))

        @pl.when(c == pl.num_programs(1) - 1)
        def _finalize():
            avg2d = _rows_from_flat(sum_sc[...] * inv_c, H, W)
            mx2d = _rows_from_flat(max_sc[...], H, W)
            attn2d = _conv7x7_sigmoid(avg2d, mx2d, w_ref, H, W)
            attn_ref[0] = _flat_from_rows(attn2d, H, W)            # (1, H*W), lane-dense

    return kernel


def _gate_kernel(x_ref, attn_ref, o_ref):
    # Pass 2: lane-dense gated store in the streaming dtype, (c_blk, HW) * (1, HW).
    o_ref[0] = x_ref[0] * attn_ref[0].astype(x_ref.dtype)


# ---------------------------------------------------------------------------
# Wrapper
# ---------------------------------------------------------------------------
def dec_spatial_attention(x, conv_weight, *, c_block=None):
    """x: (N, C, H, W); conv_weight: (1, 2, K, K) float32 (no bias). Output in x.dtype."""
    N, C, H, W = x.shape
    HW = H * W
    dtype = x.dtype
    itemsize = x.dtype.itemsize

    xf = x.reshape(N, C, HW)                                  # lane-dense, native dtype
    w_flat = conv_weight.reshape(-1).astype(jnp.float32)      # (2*K*K,), OIHW order

    phys = _tpu_vmem_capacity_bytes()
    cap = _scoped_vmem_cap(phys)
    budget = cap - _HEADROOM_BYTES
    is_two_core_chip = phys < (100 << 20)                     # v7x proxy (64 MiB per TC)

    # Fused eligibility: double-buffered (in + out) blocks (+ a transient f32 copy for
    # sub-f32 inputs) must fit the scoped budget.
    fused_bytes = 4 * C * HW * itemsize + (C * HW * 4 if itemsize < 4 else 0)
    fused_fits = fused_bytes <= budget

    # On 2-TC chips keep >= 2 parallel grid steps: with a single batch the fused grid is
    # (1,), so prefer the tiled path (gate pass has grid (N, n_c), both axes parallel).
    force_tiled_for_parallelism = is_two_core_chip and N < 2 and C >= 16

    want_fused = fused_fits and not force_tiled_for_parallelism
    if c_block is not None:
        want_fused = want_fused and c_block >= C

    if want_fused:
        # ---- fused single pass: one read + one write of x ----
        out = pl.pallas_call(
            _make_fused_kernel(C, H, W),
            out_shape=jax.ShapeDtypeStruct((N, C, HW), dtype),
            grid=(N,),
            in_specs=[
                pl.BlockSpec((1, C, HW), lambda b: (b, 0, 0)),
                pl.BlockSpec(memory_space=pltpu.MemorySpace.SMEM),
            ],
            out_specs=pl.BlockSpec((1, C, HW), lambda b: (b, 0, 0)),
            compiler_params=pltpu.CompilerParams(
                dimension_semantics=("parallel",),
                vmem_limit_bytes=cap),
        )(xf, w_flat)
        return out.reshape(N, C, H, W)

    # ---- channel-tiled two-pass path (small per-step VMEM; extra parallel grid work) ----
    if c_block is not None:
        cb1 = cb2 = max(1, min(int(c_block), C))
    else:
        # Pass 1 only double-buffers its input (output block + scratch are tiny), so it
        # can take a ~2x larger channel tile than pass 2 within the same budget.
        per_c_p1 = 2 * HW * itemsize + (HW * 4 if itemsize < 4 else 0)
        per_c_p2 = 4 * HW * itemsize
        cb1 = _pick_c_block(budget, per_c_p1, C)
        cb2 = _pick_c_block(budget, per_c_p2, C)
        if force_tiled_for_parallelism and cb2 >= C:
            half = ((C + 1) // 2 + 7) // 8 * 8
            if half < C:
                cb2 = half                                    # >= 2 parallel gate tiles
    n_c1 = -(-C // cb1)
    n_c2 = -(-C // cb2)

    # Pass 1: per-batch attention map; C is the trailing reduction ("arbitrary") axis.
    attn = pl.pallas_call(
        _make_attn_map_kernel(C, H, W, cb1),
        out_shape=jax.ShapeDtypeStruct((N, 1, HW), jnp.float32),
        grid=(N, n_c1),
        in_specs=[
            pl.BlockSpec((1, cb1, HW), lambda b, c: (b, c, 0)),
            pl.BlockSpec(memory_space=pltpu.MemorySpace.SMEM),
        ],
        out_specs=pl.BlockSpec((1, 1, HW), lambda b, c: (b, 0, 0)),
        scratch_shapes=[pltpu.VMEM((1, HW), jnp.float32),
                        pltpu.VMEM((1, HW), jnp.float32)],
        compiler_params=pltpu.CompilerParams(
            dimension_semantics=("parallel", "arbitrary"),
            vmem_limit_bytes=cap),
    )(xf, w_flat)

    # Pass 2: apply the gate per (batch, channel-tile); both axes parallel (megacore).
    out = pl.pallas_call(
        _gate_kernel,
        out_shape=jax.ShapeDtypeStruct((N, C, HW), dtype),
        grid=(N, n_c2),
        in_specs=[
            pl.BlockSpec((1, cb2, HW), lambda b, c: (b, c, 0)),
            pl.BlockSpec((1, 1, HW), lambda b, c: (b, 0, 0)),
        ],
        out_specs=pl.BlockSpec((1, cb2, HW), lambda b, c: (b, c, 0)),
        compiler_params=pltpu.CompilerParams(
            dimension_semantics=("parallel", "parallel"),
            vmem_limit_bytes=cap),
    )(xf, attn)
    return out.reshape(N, C, H, W)


# ---------------------------------------------------------------------------
# Pure-JAX reference
# ---------------------------------------------------------------------------
def _reference(x, conv_weight):
    avg = jnp.mean(x, axis=1, keepdims=True)
    mx = jnp.max(x, axis=1, keepdims=True)
    cat = jnp.concatenate([avg, mx], axis=1)
    out = jax.lax.conv_general_dilated(
        cat, conv_weight, window_strides=(1, 1),
        padding=((P, P), (P, P)),
        dimension_numbers=("NCHW", "OIHW", "NCHW"),
        precision=jax.lax.Precision.HIGHEST)
    return x * jax.nn.sigmoid(out)


if __name__ == "__main__":
    key = jax.random.PRNGKey(0)
    kx, kx2, kx3, kw = jax.random.split(key, 4)

    # Deterministic Conv2d(2, 1, 7, bias=False) weight (Kaiming-uniform-style bound).
    fan_in = 2 * K * K
    bound = 1.0 / math.sqrt(fan_in)
    conv_weight = jax.random.uniform(kw, (1, 2, K, K), jnp.float32, -bound, bound)

    # 1) small input -> fused single-pass path.
    N, C, H, W = 2, 4, 16, 16
    x = jax.random.normal(kx, (N, C, H, W), dtype=jnp.float32)
    out = jax.block_until_ready(dec_spatial_attention(x, conv_weight))
    ref = _reference(x, conv_weight)
    assert out.shape == (N, C, H, W) and out.dtype == x.dtype
    assert jnp.allclose(out, ref, atol=1e-5, rtol=1e-5), "fused path mismatch vs reference"

    # 2) channel-tiled two-pass path (divisible channel tile).
    N2, C2 = 2, 16
    x2 = jax.random.normal(kx2, (N2, C2, H, W), dtype=jnp.float32)
    out2 = jax.block_until_ready(dec_spatial_attention(x2, conv_weight, c_block=8))
    ref2 = _reference(x2, conv_weight)
    assert jnp.allclose(out2, ref2, atol=1e-5, rtol=1e-5), "tiled path mismatch vs reference"

    # 3) channel-tiled path with a non-dividing tile (masked tail in the reduction).
    N3, C3 = 2, 20
    x3 = jax.random.normal(kx3, (N3, C3, H, W), dtype=jnp.float32)
    out3 = jax.block_until_ready(dec_spatial_attention(x3, conv_weight, c_block=8))
    ref3 = _reference(x3, conv_weight)
    assert jnp.allclose(out3, ref3, atol=1e-5, rtol=1e-5), "masked-tail path mismatch vs reference"

    print("KERNEL_OK")
</pallas_src>

<mosaic_0001>
module attributes {stable_mosaic.version = 11 : i64} {
  func.func @kernel(%arg0: i32, %arg1: memref<1x4x256xf32, #tpu.memory_space<vmem>>, %arg2: memref<98xf32, #tpu.memory_space<smem>>, %arg3: memref<1x4x256xf32, #tpu.memory_space<vmem>>) attributes {dimension_semantics = [#tpu.dimension_semantics<parallel>], iteration_bounds = array<i64: 2>, scalar_prefetch = 0 : i64, scratch_operands = 0 : i64, tpu.core_type = #tpu.core_type<tc>, window_params = [{transform_indices = @transform_0, window_bounds = array<i64: 1, 4, 256>}, {transform_indices = @transform_1, window_bounds = array<i64: 98>}, {transform_indices = @transform_2, window_bounds = array<i64: 1, 4, 256>}]} {
    %c0 = arith.constant 0 : index
    %c0_0 = arith.constant 0 : index
    %c0_1 = arith.constant 0 : index
    %0 = vector.load %arg1[%c0, %c0_0, %c0_1] : memref<1x4x256xf32, #tpu.memory_space<vmem>>, vector<1x4x256xf32>
    %1 = vector.shape_cast %0 : vector<1x4x256xf32> to vector<4x256xf32>
    %cst = arith.constant dense<0.000000e+00> : vector<256xf32>
    %2 = vector.multi_reduction <add>, %1, %cst [0] : vector<4x256xf32> to vector<256xf32>
    %3 = vector.shape_cast %2 : vector<256xf32> to vector<1x256xf32>
    %cst_2 = arith.constant 2.500000e-01 : f32
    %4 = vector.broadcast %cst_2 : f32 to vector<1x256xf32>
    %5 = arith.mulf %3, %4 : vector<1x256xf32>
    %cst_3 = arith.constant dense<0xFF800000> : vector<256xf32>
    %6 = vector.multi_reduction <maximumf>, %1, %cst_3 [0] : vector<4x256xf32> to vector<256xf32>
    %7 = vector.shape_cast %6 : vector<256xf32> to vector<1x256xf32>
    %8 = vector.extract_strided_slice %5 {offsets = [0, 0], sizes = [1, 16], strides = [1, 1]} : vector<1x256xf32> to vector<1x16xf32>
    %9 = vector.extract_strided_slice %5 {offsets = [0, 16], sizes = [1, 16], strides = [1, 1]} : vector<1x256xf32> to vector<1x16xf32>
    %10 = vector.extract_strided_slice %5 {offsets = [0, 32], sizes = [1, 16], strides = [1, 1]} : vector<1x256xf32> to vector<1x16xf32>
    %11 = vector.extract_strided_slice %5 {offsets = [0, 48], sizes = [1, 16], strides = [1, 1]} : vector<1x256xf32> to vector<1x16xf32>
    %12 = vector.extract_strided_slice %5 {offsets = [0, 64], sizes = [1, 16], strides = [1, 1]} : vector<1x256xf32> to vector<1x16xf32>
    %13 = vector.extract_strided_slice %5 {offsets = [0, 80], sizes = [1, 16], strides = [1, 1]} : vector<1x256xf32> to vector<1x16xf32>
    %14 = vector.extract_strided_slice %5 {offsets = [0, 96], sizes = [1, 16], strides = [1, 1]} : vector<1x256xf32> to vector<1x16xf32>
    %15 = vector.extract_strided_slice %5 {offsets = [0, 112], sizes = [1, 16], strides = [1, 1]} : vector<1x256xf32> to vector<1x16xf32>
    %16 = vector.extract_strided_slice %5 {offsets = [0, 128], sizes = [1, 16], strides = [1, 1]} : vector<1x256xf32> to vector<1x16xf32>
    %17 = vector.extract_strided_slice %5 {offsets = [0, 144], sizes = [1, 16], strides = [1, 1]} : vector<1x256xf32> to vector<1x16xf32>
    %18 = vector.extract_strided_slice %5 {offsets = [0, 160], sizes = [1, 16], strides = [1, 1]} : vector<1x256xf32> to vector<1x16xf32>
    %19 = vector.extract_strided_slice %5 {offsets = [0, 176], sizes = [1, 16], strides = [1, 1]} : vector<1x256xf32> to vector<1x16xf32>
    %20 = vector.extract_strided_slice %5 {offsets = [0, 192], sizes = [1, 16], strides = [1, 1]} : vector<1x256xf32> to vector<1x16xf32>
    %21 = vector.extract_strided_slice %5 {offsets = [0, 208], sizes = [1, 16], strides = [1, 1]} : vector<1x256xf32> to vector<1x16xf32>
    %22 = vector.extract_strided_slice %5 {offsets = [0, 224], sizes = [1, 16], strides = [1, 1]} : vector<1x256xf32> to vector<1x16xf32>
    %23 = vector.extract_strided_slice %5 {offsets = [0, 240], sizes = [1, 16], strides = [1, 1]} : vector<1x256xf32> to vector<1x16xf32>
    %24 = tpu.concatenate %8, %9, %10, %11, %12, %13, %14, %15, %16, %17, %18, %19, %20, %21, %22, %23 in 0 : vector<1x16xf32>, vector<1x16xf32>, vector<1x16xf32>, vector<1x16xf32>, vector<1x16xf32>, vector<1x16xf32>, vector<1x16xf32>, vector<1x16xf32>, vector<1x16xf32>, vector<1x16xf32>, vector<1x16xf32>, vector<1x16xf32>, vector<1x16xf32>, vector<1x16xf32>, vector<1x16xf32>, vector<1x16xf32> -> vector<16x16xf32>
    %25 = vector.extract_strided_slice %7 {offsets = [0, 0], sizes = [1, 16], strides = [1, 1]} : vector<1x256xf32> to vector<1x16xf32>
    %26 = vector.extract_strided_slice %7 {offsets = [0, 16], sizes = [1, 16], strides = [1, 1]} : vector<1x256xf32> to vector<1x16xf32>
    %27 = vector.extract_strided_slice %7 {offsets = [0, 32], sizes = [1, 16], strides = [1, 1]} : vector<1x256xf32> to vector<1x16xf32>
    %28 = vector.extract_strided_slice %7 {offsets = [0, 48], sizes = [1, 16], strides = [1, 1]} : vector<1x256xf32> to vector<1x16xf32>
    %29 = vector.extract_strided_slice %7 {offsets = [0, 64], sizes = [1, 16], strides = [1, 1]} : vector<1x256xf32> to vector<1x16xf32>
    %30 = vector.extract_strided_slice %7 {offsets = [0, 80], sizes = [1, 16], strides = [1, 1]} : vector<1x256xf32> to vector<1x16xf32>
    %31 = vector.extract_strided_slice %7 {offsets = [0, 96], sizes = [1, 16], strides = [1, 1]} : vector<1x256xf32> to vector<1x16xf32>
    %32 = vector.extract_strided_slice %7 {offsets = [0, 112], sizes = [1, 16], strides = [1, 1]} : vector<1x256xf32> to vector<1x16xf32>
    %33 = vector.extract_strided_slice %7 {offsets = [0, 128], sizes = [1, 16], strides = [1, 1]} : vector<1x256xf32> to vector<1x16xf32>
    %34 = vector.extract_strided_slice %7 {offsets = [0, 144], sizes = [1, 16], strides = [1, 1]} : vector<1x256xf32> to vector<1x16xf32>
    %35 = vector.extract_strided_slice %7 {offsets = [0, 160], sizes = [1, 16], strides = [1, 1]} : vector<1x256xf32> to vector<1x16xf32>
    %36 = vector.extract_strided_slice %7 {offsets = [0, 176], sizes = [1, 16], strides = [1, 1]} : vector<1x256xf32> to vector<1x16xf32>
    %37 = vector.extract_strided_slice %7 {offsets = [0, 192], sizes = [1, 16], strides = [1, 1]} : vector<1x256xf32> to vector<1x16xf32>
    %38 = vector.extract_strided_slice %7 {offsets = [0, 208], sizes = [1, 16], strides = [1, 1]} : vector<1x256xf32> to vector<1x16xf32>
    %39 = vector.extract_strided_slice %7 {offsets = [0, 224], sizes = [1, 16], strides = [1, 1]} : vector<1x256xf32> to vector<1x16xf32>
    %40 = vector.extract_strided_slice %7 {offsets = [0, 240], sizes = [1, 16], strides = [1, 1]} : vector<1x256xf32> to vector<1x16xf32>
    %41 = tpu.concatenate %25, %26, %27, %28, %29, %30, %31, %32, %33, %34, %35, %36, %37, %38, %39, %40 in 0 : vector<1x16xf32>, vector<1x16xf32>, vector<1x16xf32>, vector<1x16xf32>, vector<1x16xf32>, vector<1x16xf32>, vector<1x16xf32>, vector<1x16xf32>, vector<1x16xf32>, vector<1x16xf32>, vector<1x16xf32>, vector<1x16xf32>, vector<1x16xf32>, vector<1x16xf32>, vector<1x16xf32>, vector<1x16xf32> -> vector<16x16xf32>
    %c0_i32 = arith.constant 0 : i32
    %42 = arith.sitofp %c0_i32 : i32 to f32
    %43 = vector.broadcast %42 : f32 to vector<3x16xf32>
    %44 = tpu.concatenate %43, %24 in 0 : vector<3x16xf32>, vector<16x16xf32> -> vector<19x16xf32>
    %45 = vector.broadcast %42 : f32 to vector<3x16xf32>
    %46 = tpu.concatenate %44, %45 in 0 : vector<19x16xf32>, vector<3x16xf32> -> vector<22x16xf32>
    %47 = vector.broadcast %42 : f32 to vector<22x3xf32>
    %48 = tpu.concatenate %47, %46 in 1 : vector<22x3xf32>, vector<22x16xf32> -> vector<22x19xf32>
    %49 = vector.broadcast %42 : f32 to vector<22x3xf32>
    %50 = tpu.concatenate %48, %49 in 1 : vector<22x19xf32>, vector<22x3xf32> -> vector<22x22xf32>
    %c0_i32_4 = arith.constant 0 : i32
    %51 = arith.sitofp %c0_i32_4 : i32 to f32
    %52 = vector.broadcast %51 : f32 to vector<3x16xf32>
    %53 = tpu.concatenate %52, %41 in 0 : vector<3x16xf32>, vector<16x16xf32> -> vector<19x16xf32>
    %54 = vector.broadcast %51 : f32 to vector<3x16xf32>
    %55 = tpu.concatenate %53, %54 in 0 : vector<19x16xf32>, vector<3x16xf32> -> vector<22x16xf32>
    %56 = vector.broadcast %51 : f32 to vector<22x3xf32>
    %57 = tpu.concatenate %56, %55 in 1 : vector<22x3xf32>, vector<22x16xf32> -> vector<22x19xf32>
    %58 = vector.broadcast %51 : f32 to vector<22x3xf32>
    %59 = tpu.concatenate %57, %58 in 1 : vector<22x19xf32>, vector<22x3xf32> -> vector<22x22xf32>
    %c0_5 = arith.constant 0 : index
    %60 = memref.load %arg2[%c0_5] : memref<98xf32, #tpu.memory_space<smem>>
    %c1 = arith.constant 1 : index
    %61 = memref.load %arg2[%c1] : memref<98xf32, #tpu.memory_space<smem>>
    %c2 = arith.constant 2 : index
    %62 = memref.load %arg2[%c2] : memref<98xf32, #tpu.memory_space<smem>>
    %c3 = arith.constant 3 : index
    %63 = memref.load %arg2[%c3] : memref<98xf32, #tpu.memory_space<smem>>
    %c4 = arith.constant 4 : index
    %64 = memref.load %arg2[%c4] : memref<98xf32, #tpu.memory_space<smem>>
    %c5 = arith.constant 5 : index
    %65 = memref.load %arg2[%c5] : memref<98xf32, #tpu.memory_space<smem>>
    %c6 = arith.constant 6 : index
    %66 = memref.load %arg2[%c6] : memref<98xf32, #tpu.memory_space<smem>>
    %c7 = arith.constant 7 : index
    %67 = memref.load %arg2[%c7] : memref<98xf32, #tpu.memory_space<smem>>
    %c8 = arith.constant 8 : index
    %68 = memref.load %arg2[%c8] : memref<98xf32, #tpu.memory_space<smem>>
    %c9 = arith.constant 9 : index
    %69 = memref.load %arg2[%c9] : memref<98xf32, #tpu.memory_space<smem>>
    %c10 = arith.constant 10 : index
    %70 = memref.load %arg2[%c10] : memref<98xf32, #tpu.memory_space<smem>>
    %c11 = arith.constant 11 : index
    %71 = memref.load %arg2[%c11] : memref<98xf32, #tpu.memory_space<smem>>
    %c12 = arith.constant 12 : index
    %72 = memref.load %arg2[%c12] : memref<98xf32, #tpu.memory_space<smem>>
    %c13 = arith.constant 13 : index
    %73 = memref.load %arg2[%c13] : memref<98xf32, #tpu.memory_space<smem>>
    %c14 = arith.constant 14 : index
    %74 = memref.load %arg2[%c14] : memref<98xf32, #tpu.memory_space<smem>>
    %c15 = arith.constant 15 : index
    %75 = memref.load %arg2[%c15] : memref<98xf32, #tpu.memory_space<smem>>
    %c16 = arith.constant 16 : index
    %76 = memref.load %arg2[%c16] : memref<98xf32, #tpu.memory_space<smem>>
    %c17 = arith.constant 17 : index
    %77 = memref.load %arg2[%c17] : memref<98xf32, #tpu.memory_space<smem>>
    %c18 = arith.constant 18 : index
    %78 = memref.load %arg2[%c18] : memref<98xf32, #tpu.memory_space<smem>>
    %c19 = arith.constant 19 : index
    %79 = memref.load %arg2[%c19] : memref<98xf32, #tpu.memory_space<smem>>
    %c20 = arith.constant 20 : index
    %80 = memref.load %arg2[%c20] : memref<98xf32, #tpu.memory_space<smem>>
    %c21 = arith.constant 21 : index
    %81 = memref.load %arg2[%c21] : memref<98xf32, #tpu.memory_space<smem>>
    %c22 = arith.constant 22 : index
    %82 = memref.load %arg2[%c22] : memref<98xf32, #tpu.memory_space<smem>>
    %c23 = arith.constant 23 : index
    %83 = memref.load %arg2[%c23] : memref<98xf32, #tpu.memory_space<smem>>
    %c24 = arith.constant 24 : index
    %84 = memref.load %arg2[%c24] : memref<98xf32, #tpu.memory_space<smem>>
    %c25 = arith.constant 25 : index
    %85 = memref.load %arg2[%c25] : memref<98xf32, #tpu.memory_space<smem>>
    %c26 = arith.constant 26 : index
    %86 = memref.load %arg2[%c26] : memref<98xf32, #tpu.memory_space<smem>>
    %c27 = arith.constant 27 : index
    %87 = memref.load %arg2[%c27] : memref<98xf32, #tpu.memory_space<smem>>
    %c28 = arith.constant 28 : index
    %88 = memref.load %arg2[%c28] : memref<98xf32, #tpu.memory_space<smem>>
    %c29 = arith.constant 29 : index
    %89 = memref.load %arg2[%c29] : memref<98xf32, #tpu.memory_space<smem>>
    %c30 = arith.constant 30 : index
    %90 = memref.load %arg2[%c30] : memref<98xf32, #tpu.memory_space<smem>>
    %c31 = arith.constant 31 : index
    %91 = memref.load %arg2[%c31] : memref<98xf32, #tpu.memory_space<smem>>
    %c32 = arith.constant 32 : index
    %92 = memref.load %arg2[%c32] : memref<98xf32, #tpu.memory_space<smem>>
    %c33 = arith.constant 33 : index
    %93 = memref.load %arg2[%c33] : memref<98xf32, #tpu.memory_space<smem>>
    %c34 = arith.constant 34 : index
    %94 = memref.load %arg2[%c34] : memref<98xf32, #tpu.memory_space<smem>>
    %c35 = arith.constant 35 : index
    %95 = memref.load %arg2[%c35] : memref<98xf32, #tpu.memory_space<smem>>
    %c36 = arith.constant 36 : index
    %96 = memref.load %arg2[%c36] : memref<98xf32, #tpu.memory_space<smem>>
    %c37 = arith.constant 37 : index
    %97 = memref.load %arg2[%c37] : memref<98xf32, #tpu.memory_space<smem>>
    %c38 = arith.constant 38 : index
    %98 = memref.load %arg2[%c38] : memref<98xf32, #tpu.memory_space<smem>>
    %c39 = arith.constant 39 : index
    %99 = memref.load %arg2[%c39] : memref<98xf32, #tpu.memory_space<smem>>
    %c40 = arith.constant 40 : index
    %100 = memref.load %arg2[%c40] : memref<98xf32, #tpu.memory_space<smem>>
    %c41 = arith.constant 41 : index
    %101 = memref.load %arg2[%c41] : memref<98xf32, #tpu.memory_space<smem>>
    %c42 = arith.constant 42 : index
    %102 = memref.load %arg2[%c42] : memref<98xf32, #tpu.memory_space<smem>>
    %c43 = arith.constant 43 : index
    %103 = memref.load %arg2[%c43] : memref<98xf32, #tpu.memory_space<smem>>
    %c44 = arith.constant 44 : index
    %104 = memref.load %arg2[%c44] : memref<98xf32, #tpu.memory_space<smem>>
    %c45 = arith.constant 45 : index
    %105 = memref.load %arg2[%c45] : memref<98xf32, #tpu.memory_space<smem>>
    %c46 = arith.constant 46 : index
    %106 = memref.load %arg2[%c46] : memref<98xf32, #tpu.memory_space<smem>>
    %c47 = arith.constant 47 : index
    %107 = memref.load %arg2[%c47] : memref<98xf32, #tpu.memory_space<smem>>
    %c48 = arith.constant 48 : index
    %108 = memref.load %arg2[%c48] : memref<98xf32, #tpu.memory_space<smem>>
    %c49 = arith.constant 49 : index
    %109 = memref.load %arg2[%c49] : memref<98xf32, #tpu.memory_space<smem>>
    %c50 = arith.constant 50 : index
    %110 = memref.load %arg2[%c50] : memref<98xf32, #tpu.memory_space<smem>>
    %c51 = arith.constant 51 : index
    %111 = memref.load %arg2[%c51] : memref<98xf32, #tpu.memory_space<smem>>
    %c52 = arith.constant 52 : index
    %112 = memref.load %arg2[%c52] : memref<98xf32, #tpu.memory_space<smem>>
    %c53 = arith.constant 53 : index
    %113 = memref.load %arg2[%c53] : memref<98xf32, #tpu.memory_space<smem>>
    %c54 = arith.constant 54 : index
    %114 = memref.load %arg2[%c54] : memref<98xf32, #tpu.memory_space<smem>>
    %c55 = arith.constant 55 : index
    %115 = memref.load %arg2[%c55] : memref<98xf32, #tpu.memory_space<smem>>
    %c56 = arith.constant 56 : index
    %116 = memref.load %arg2[%c56] : memref<98xf32, #tpu.memory_space<smem>>
    %c57 = arith.constant 57 : index
    %117 = memref.load %arg2[%c57] : memref<98xf32, #tpu.memory_space<smem>>
    %c58 = arith.constant 58 : index
    %118 = memref.load %arg2[%c58] : memref<98xf32, #tpu.memory_space<smem>>
    %c59 = arith.constant 59 : index
    %119 = memref.load %arg2[%c59] : memref<98xf32, #tpu.memory_space<smem>>
    %c60 = arith.constant 60 : index
    %120 = memref.load %arg2[%c60] : memref<98xf32, #tpu.memory_space<smem>>
    %c61 = arith.constant 61 : index
    %121 = memref.load %arg2[%c61] : memref<98xf32, #tpu.memory_space<smem>>
    %c62 = arith.constant 62 : index
    %122 = memref.load %arg2[%c62] : memref<98xf32, #tpu.memory_space<smem>>
    %c63 = arith.constant 63 : index
    %123 = memref.load %arg2[%c63] : memref<98xf32, #tpu.memory_space<smem>>
    %c64 = arith.constant 64 : index
    %124 = memref.load %arg2[%c64] : memref<98xf32, #tpu.memory_space<smem>>
    %c65 = arith.constant 65 : index
    %125 = memref.load %arg2[%c65] : memref<98xf32, #tpu.memory_space<smem>>
    %c66 = arith.constant 66 : index
    %126 = memref.load %arg2[%c66] : memref<98xf32, #tpu.memory_space<smem>>
    %c67 = arith.constant 67 : index
    %127 = memref.load %arg2[%c67] : memref<98xf32, #tpu.memory_space<smem>>
    %c68 = arith.constant 68 : index
    %128 = memref.load %arg2[%c68] : memref<98xf32, #tpu.memory_space<smem>>
    %c69 = arith.constant 69 : index
    %129 = memref.load %arg2[%c69] : memref<98xf32, #tpu.memory_space<smem>>
    %c70 = arith.constant 70 : index
    %130 = memref.load %arg2[%c70] : memref<98xf32, #tpu.memory_space<smem>>
    %c71 = arith.constant 71 : index
    %131 = memref.load %arg2[%c71] : memref<98xf32, #tpu.memory_space<smem>>
    %c72 = arith.constant 72 : index
    %132 = memref.load %arg2[%c72] : memref<98xf32, #tpu.memory_space<smem>>
    %c73 = arith.constant 73 : index
    %133 = memref.load %arg2[%c73] : memref<98xf32, #tpu.memory_space<smem>>
    %c74 = arith.constant 74 : index
    %134 = memref.load %arg2[%c74] : memref<98xf32, #tpu.memory_space<smem>>
    %c75 = arith.constant 75 : index
    %135 = memref.load %arg2[%c75] : memref<98xf32, #tpu.memory_space<smem>>
    %c76 = arith.constant 76 : index
    %136 = memref.load %arg2[%c76] : memref<98xf32, #tpu.memory_space<smem>>
    %c77 = arith.constant 77 : index
    %137 = memref.load %arg2[%c77] : memref<98xf32, #tpu.memory_space<smem>>
    %c78 = arith.constant 78 : index
    %138 = memref.load %arg2[%c78] : memref<98xf32, #tpu.memory_space<smem>>
    %c79 = arith.constant 79 : index
    %139 = memref.load %arg2[%c79] : memref<98xf32, #tpu.memory_space<smem>>
    %c80 = arith.constant 80 : index
    %140 = memref.load %arg2[%c80] : memref<98xf32, #tpu.memory_space<smem>>
    %c81 = arith.constant 81 : index
    %141 = memref.load %arg2[%c81] : memref<98xf32, #tpu.memory_space<smem>>
    %c82 = arith.constant 82 : index
    %142 = memref.load %arg2[%c82] : memref<98xf32, #tpu.memory_space<smem>>
    %c83 = arith.constant 83 : index
    %143 = memref.load %arg2[%c83] : memref<98xf32, #tpu.memory_space<smem>>
    %c84 = arith.constant 84 : index
    %144 = memref.load %arg2[%c84] : memref<98xf32, #tpu.memory_space<smem>>
    %c85 = arith.constant 85 : index
    %145 = memref.load %arg2[%c85] : memref<98xf32, #tpu.memory_space<smem>>
    %c86 = arith.constant 86 : index
    %146 = memref.load %arg2[%c86] : memref<98xf32, #tpu.memory_space<smem>>
    %c87 = arith.constant 87 : index
    %147 = memref.load %arg2[%c87] : memref<98xf32, #tpu.memory_space<smem>>
    %c88 = arith.constant 88 : index
    %148 = memref.load %arg2[%c88] : memref<98xf32, #tpu.memory_space<smem>>
    %c89 = arith.constant 89 : index
    %149 = memref.load %arg2[%c89] : memref<98xf32, #tpu.memory_space<smem>>
    %c90 = arith.constant 90 : index
    %150 = memref.load %arg2[%c90] : memref<98xf32, #tpu.memory_space<smem>>
    %c91 = arith.constant 91 : index
    %151 = memref.load %arg2[%c91] : memref<98xf32, #tpu.memory_space<smem>>
    %c92 = arith.constant 92 : index
    %152 = memref.load %arg2[%c92] : memref<98xf32, #tpu.memory_space<smem>>
    %c93 = arith.constant 93 : index
    %153 = memref.load %arg2[%c93] : memref<98xf32, #tpu.memory_space<smem>>
    %c94 = arith.constant 94 : index
    %154 = memref.load %arg2[%c94] : memref<98xf32, #tpu.memory_space<smem>>
    %c95 = arith.constant 95 : index
    %155 = memref.load %arg2[%c95] : memref<98xf32, #tpu.memory_space<smem>>
    %c96 = arith.constant 96 : index
    %156 = memref.load %arg2[%c96] : memref<98xf32, #tpu.memory_space<smem>>
    %c97 = arith.constant 97 : index
    %157 = memref.load %arg2[%c97] : memref<98xf32, #tpu.memory_space<smem>>
    %cst_6 = arith.constant 0.000000e+00 : f32
    %158 = vector.broadcast %cst_6 : f32 to vector<16x16xf32>
    %cst_7 = arith.constant 0.000000e+00 : f32
    %159 = vector.broadcast %cst_7 : f32 to vector<16x16xf32>
    %cst_8 = arith.constant 0.000000e+00 : f32
    %160 = vector.broadcast %cst_8 : f32 to vector<16x16xf32>
    %cst_9 = arith.constant 0.000000e+00 : f32
    %161 = vector.broadcast %cst_9 : f32 to vector<16x16xf32>
    %162 = vector.extract_strided_slice %50 {offsets = [0, 0], sizes = [22, 16], strides = [1, 1]} : vector<22x22xf32> to vector<22x16xf32>
    %163 = vector.extract_strided_slice %59 {offsets = [0, 0], sizes = [22, 16], strides = [1, 1]} : vector<22x22xf32> to vector<22x16xf32>
    %164 = vector.extract_strided_slice %162 {offsets = [0, 0], sizes = [16, 16], strides = [1, 1]} : vector<22x16xf32> to vector<16x16xf32>
    %165 = vector.broadcast %60 : f32 to vector<16x16xf32>
    %166 = arith.mulf %165, %164 : vector<16x16xf32>
    %167 = vector.extract_strided_slice %163 {offsets = [0, 0], sizes = [16, 16], strides = [1, 1]} : vector<22x16xf32> to vector<16x16xf32>
    %168 = vector.broadcast %109 : f32 to vector<16x16xf32>
    %169 = arith.mulf %168, %167 : vector<16x16xf32>
    %170 = arith.addf %166, %169 : vector<16x16xf32>
    %171 = arith.addf %158, %170 : vector<16x16xf32>
    %172 = vector.extract_strided_slice %162 {offsets = [1, 0], sizes = [16, 16], strides = [1, 1]} : vector<22x16xf32> to vector<16x16xf32>
    %173 = vector.broadcast %67 : f32 to vector<16x16xf32>
    %174 = arith.mulf %173, %172 : vector<16x16xf32>
    %175 = vector.extract_strided_slice %163 {offsets = [1, 0], sizes = [16, 16], strides = [1, 1]} : vector<22x16xf32> to vector<16x16xf32>
    %176 = vector.broadcast %116 : f32 to vector<16x16xf32>
    %177 = arith.mulf %176, %175 : vector<16x16xf32>
    %178 = arith.addf %174, %177 : vector<16x16xf32>
    %179 = arith.addf %159, %178 : vector<16x16xf32>
    %180 = vector.extract_strided_slice %162 {offsets = [2, 0], sizes = [16, 16], strides = [1, 1]} : vector<22x16xf32> to vector<16x16xf32>
    %181 = vector.broadcast %74 : f32 to vector<16x16xf32>
    %182 = arith.mulf %181, %180 : vector<16x16xf32>
    %183 = vector.extract_strided_slice %163 {offsets = [2, 0], sizes = [16, 16], strides = [1, 1]} : vector<22x16xf32> to vector<16x16xf32>
    %184 = vector.broadcast %123 : f32 to vector<16x16xf32>
    %185 = arith.mulf %184, %183 : vector<16x16xf32>
    %186 = arith.addf %182, %185 : vector<16x16xf32>
    %187 = arith.addf %160, %186 : vector<16x16xf32>
    %188 = vector.extract_strided_slice %162 {offsets = [3, 0], sizes = [16, 16], strides = [1, 1]} : vector<22x16xf32> to vector<16x16xf32>
    %189 = vector.broadcast %81 : f32 to vector<16x16xf32>
    %190 = arith.mulf %189, %188 : vector<16x16xf32>
    %191 = vector.extract_strided_slice %163 {offsets = [3, 0], sizes = [16, 16], strides = [1, 1]} : vector<22x16xf32> to vector<16x16xf32>
    %192 = vector.broadcast %130 : f32 to vector<16x16xf32>
    %193 = arith.mulf %192, %191 : vector<16x16xf32>
    %194 = arith.addf %190, %193 : vector<16x16xf32>
    %195 = arith.addf %161, %194 : vector<16x16xf32>
    %196 = vector.extract_strided_slice %162 {offsets = [4, 0], sizes = [16, 16], strides = [1, 1]} : vector<22x16xf32> to vector<16x16xf32>
    %197 = vector.broadcast %88 : f32 to vector<16x16xf32>
    %198 = arith.mulf %197, %196 : vector<16x16xf32>
    %199 = vector.extract_strided_slice %163 {offsets = [4, 0], sizes = [16, 16], strides = [1, 1]} : vector<22x16xf32> to vector<16x16xf32>
    %200 = vector.broadcast %137 : f32 to vector<16x16xf32>
    %201 = arith.mulf %200, %199 : vector<16x16xf32>
    %202 = arith.addf %198, %201 : vector<16x16xf32>
    %203 = arith.addf %171, %202 : vector<16x16xf32>
    %204 = vector.extract_strided_slice %162 {offsets = [5, 0], sizes = [16, 16], strides = [1, 1]} : vector<22x16xf32> to vector<16x16xf32>
    %205 = vector.broadcast %95 : f32 to vector<16x16xf32>
    %206 = arith.mulf %205, %204 : vector<16x16xf32>
    %207 = vector.extract_strided_slice %163 {offsets = [5, 0], sizes = [16, 16], strides = [1, 1]} : vector<22x16xf32> to vector<16x16xf32>
    %208 = vector.broadcast %144 : f32 to vector<16x16xf32>
    %209 = arith.mulf %208, %207 : vector<16x16xf32>
    %210 = arith.addf %206, %209 : vector<16x16xf32>
    %211 = arith.addf %179, %210 : vector<16x16xf32>
    %212 = vector.extract_strided_slice %162 {offsets = [6, 0], sizes = [16, 16], strides = [1, 1]} : vector<22x16xf32> to vector<16x16xf32>
    %213 = vector.broadcast %102 : f32 to vector<16x16xf32>
    %214 = arith.mulf %213, %212 : vector<16x16xf32>
    %215 = vector.extract_strided_slice %163 {offsets = [6, 0], sizes = [16, 16], strides = [1, 1]} : vector<22x16xf32> to vector<16x16xf32>
    %216 = vector.broadcast %151 : f32 to vector<16x16xf32>
    %217 = arith.mulf %216, %215 : vector<16x16xf32>
    %218 = arith.addf %214, %217 : vector<16x16xf32>
    %219 = arith.addf %187, %218 : vector<16x16xf32>
    %220 = vector.extract_strided_slice %50 {offsets = [0, 1], sizes = [22, 16], strides = [1, 1]} : vector<22x22xf32> to vector<22x16xf32>
    %221 = vector.extract_strided_slice %59 {offsets = [0, 1], sizes = [22, 16], strides = [1, 1]} : vector<22x22xf32> to vector<22x16xf32>
    %222 = vector.extract_strided_slice %220 {offsets = [0, 0], sizes = [16, 16], strides = [1, 1]} : vector<22x16xf32> to vector<16x16xf32>
    %223 = vector.broadcast %61 : f32 to vector<16x16xf32>
    %224 = arith.mulf %223, %222 : vector<16x16xf32>
    %225 = vector.extract_strided_slice %221 {offsets = [0, 0], sizes = [16, 16], strides = [1, 1]} : vector<22x16xf32> to vector<16x16xf32>
    %226 = vector.broadcast %110 : f32 to vector<16x16xf32>
    %227 = arith.mulf %226, %225 : vector<16x16xf32>
    %228 = arith.addf %224, %227 : vector<16x16xf32>
    %229 = arith.addf %195, %228 : vector<16x16xf32>
    %230 = vector.extract_strided_slice %220 {offsets = [1, 0], sizes = [16, 16], strides = [1, 1]} : vector<22x16xf32> to vector<16x16xf32>
    %231 = vector.broadcast %68 : f32 to vector<16x16xf32>
    %232 = arith.mulf %231, %230 : vector<16x16xf32>
    %233 = vector.extract_strided_slice %221 {offsets = [1, 0], sizes = [16, 16], strides = [1, 1]} : vector<22x16xf32> to vector<16x16xf32>
    %234 = vector.broadcast %117 : f32 to vector<16x16xf32>
    %235 = arith.mulf %234, %233 : vector<16x16xf32>
    %236 = arith.addf %232, %235 : vector<16x16xf32>
    %237 = arith.addf %203, %236 : vector<16x16xf32>
    %238 = vector.extract_strided_slice %220 {offsets = [2, 0], sizes = [16, 16], strides = [1, 1]} : vector<22x16xf32> to vector<16x16xf32>
    %239 = vector.broadcast %75 : f32 to vector<16x16xf32>
    %240 = arith.mulf %239, %238 : vector<16x16xf32>
    %241 = vector.extract_strided_slice %221 {offsets = [2, 0], sizes = [16, 16], strides = [1, 1]} : vector<22x16xf32> to vector<16x16xf32>
    %242 = vector.broadcast %124 : f32 to vector<16x16xf32>
    %243 = arith.mulf %242, %241 : vector<16x16xf32>
    %244 = arith.addf %240, %243 : vector<16x16xf32>
    %245 = arith.addf %211, %244 : vector<16x16xf32>
    %246 = vector.extract_strided_slice %220 {offsets = [3, 0], sizes = [16, 16], strides = [1, 1]} : vector<22x16xf32> to vector<16x16xf32>
    %247 = vector.broadcast %82 : f32 to vector<16x16xf32>
    %248 = arith.mulf %247, %246 : vector<16x16xf32>
    %249 = vector.extract_strided_slice %221 {offsets = [3, 0], sizes = [16, 16], strides = [1, 1]} : vector<22x16xf32> to vector<16x16xf32>
    %250 = vector.broadcast %131 : f32 to vector<16x16xf32>
    %251 = arith.mulf %250, %249 : vector<16x16xf32>
    %252 = arith.addf %248, %251 : vector<16x16xf32>
    %253 = arith.addf %219, %252 : vector<16x16xf32>
    %254 = vector.extract_strided_slice %220 {offsets = [4, 0], sizes = [16, 16], strides = [1, 1]} : vector<22x16xf32> to vector<16x16xf32>
    %255 = vector.broadcast %89 : f32 to vector<16x16xf32>
    %256 = arith.mulf %255, %254 : vector<16x16xf32>
    %257 = vector.extract_strided_slice %221 {offsets = [4, 0], sizes = [16, 16], strides = [1, 1]} : vector<22x16xf32> to vector<16x16xf32>
    %258 = vector.broadcast %138 : f32 to vector<16x16xf32>
    %259 = arith.mulf %258, %257 : vector<16x16xf32>
    %260 = arith.addf %256, %259 : vector<16x16xf32>
    %261 = arith.addf %229, %260 : vector<16x16xf32>
    %262 = vector.extract_strided_slice %220 {offsets = [5, 0], sizes = [16, 16], strides = [1, 1]} : vector<22x16xf32> to vector<16x16xf32>
    %263 = vector.broadcast %96 : f32 to vector<16x16xf32>
    %264 = arith.mulf %263, %262 : vector<16x16xf32>
    %265 = vector.extract_strided_slice %221 {offsets = [5, 0], sizes = [16, 16], strides = [1, 1]} : vector<22x16xf32> to vector<16x16xf32>
    %266 = vector.broadcast %145 : f32 to vector<16x16xf32>
    %267 = arith.mulf %266, %265 : vector<16x16xf32>
    %268 = arith.addf %264, %267 : vector<16x16xf32>
    %269 = arith.addf %237, %268 : vector<16x16xf32>
    %270 = vector.extract_strided_slice %220 {offsets = [6, 0], sizes = [16, 16], strides = [1, 1]} : vector<22x16xf32> to vector<16x16xf32>
    %271 = vector.broadcast %103 : f32 to vector<16x16xf32>
    %272 = arith.mulf %271, %270 : vector<16x16xf32>
    %273 = vector.extract_strided_slice %221 {offsets = [6, 0], sizes = [16, 16], strides = [1, 1]} : vector<22x16xf32> to vector<16x16xf32>
    %274 = vector.broadcast %152 : f32 to vector<16x16xf32>
    %275 = arith.mulf %274, %273 : vector<16x16xf32>
    %276 = arith.addf %272, %275 : vector<16x16xf32>
    %277 = arith.addf %245, %276 : vector<16x16xf32>
    %278 = vector.extract_strided_slice %50 {offsets = [0, 2], sizes = [22, 16], strides = [1, 1]} : vector<22x22xf32> to vector<22x16xf32>
    %279 = vector.extract_strided_slice %59 {offsets = [0, 2], sizes = [22, 16], strides = [1, 1]} : vector<22x22xf32> to vector<22x16xf32>
    %280 = vector.extract_strided_slice %278 {offsets = [0, 0], sizes = [16, 16], strides = [1, 1]} : vector<22x16xf32> to vector<16x16xf32>
    %281 = vector.broadcast %62 : f32 to vector<16x16xf32>
    %282 = arith.mulf %281, %280 : vector<16x16xf32>
    %283 = vector.extract_strided_slice %279 {offsets = [0, 0], sizes = [16, 16], strides = [1, 1]} : vector<22x16xf32> to vector<16x16xf32>
    %284 = vector.broadcast %111 : f32 to vector<16x16xf32>
    %285 = arith.mulf %284, %283 : vector<16x16xf32>
    %286 = arith.addf %282, %285 : vector<16x16xf32>
    %287 = arith.addf %253, %286 : vector<16x16xf32>
    %288 = vector.extract_strided_slice %278 {offsets = [1, 0], sizes = [16, 16], strides = [1, 1]} : vector<22x16xf32> to vector<16x16xf32>
    %289 = vector.broadcast %69 : f32 to vector<16x16xf32>
    %290 = arith.mulf %289, %288 : vector<16x16xf32>
    %291 = vector.extract_strided_slice %279 {offsets = [1, 0], sizes = [16, 16], strides = [1, 1]} : vector<22x16xf32> to vector<16x16xf32>
    %292 = vector.broadcast %118 : f32 to vector<16x16xf32>
    %293 = arith.mulf %292, %291 : vector<16x16xf32>
    %294 = arith.addf %290, %293 : vector<16x16xf32>
    %295 = arith.addf %261, %294 : vector<16x16xf32>
    %296 = vector.extract_strided_slice %278 {offsets = [2, 0], sizes = [16, 16], strides = [1, 1]} : vector<22x16xf32> to vector<16x16xf32>
    %297 = vector.broadcast %76 : f32 to vector<16x16xf32>
    %298 = arith.mulf %297, %296 : vector<16x16xf32>
    %299 = vector.extract_strided_slice %279 {offsets = [2, 0], sizes = [16, 16], strides = [1, 1]} : vector<22x16xf32> to vector<16x16xf32>
    %300 = vector.broadcast %125 : f32 to vector<16x16xf32>
    %301 = arith.mulf %300, %299 : vector<16x16xf32>
    %302 = arith.addf %298, %301 : vector<16x16xf32>
    %303 = arith.addf %269, %302 : vector<16x16xf32>
    %304 = vector.extract_strided_slice %278 {offsets = [3, 0], sizes = [16, 16], strides = [1, 1]} : vector<22x16xf32> to vector<16x16xf32>
    %305 = vector.broadcast %83 : f32 to vector<16x16xf32>
    %306 = arith.mulf %305, %304 : vector<16x16xf32>
    %307 = vector.extract_strided_slice %279 {offsets = [3, 0], sizes = [16, 16], strides = [1, 1]} : vector<22x16xf32> to vector<16x16xf32>
    %308 = vector.broadcast %132 : f32 to vector<16x16xf32>
    %309 = arith.mulf %308, %307 : vector<16x16xf32>
    %310 = arith.addf %306, %309 : vector<16x16xf32>
    %311 = arith.addf %277, %310 : vector<16x16xf32>
    %312 = vector.extract_strided_slice %278 {offsets = [4, 0], sizes = [16, 16], strides = [1, 1]} : vector<22x16xf32> to vector<16x16xf32>
    %313 = vector.broadcast %90 : f32 to vector<16x16xf32>
    %314 = arith.mulf %313, %312 : vector<16x16xf32>
    %315 = vector.extract_strided_slice %279 {offsets = [4, 0], sizes = [16, 16], strides = [1, 1]} : vector<22x16xf32> to vector<16x16xf32>
    %316 = vector.broadcast %139 : f32 to vector<16x16xf32>
    %317 = arith.mulf %316, %315 : vector<16x16xf32>
    %318 = arith.addf %314, %317 : vector<16x16xf32>
    %319 = arith.addf %287, %318 : vector<16x16xf32>
    %320 = vector.extract_strided_slice %278 {offsets = [5, 0], sizes = [16, 16], strides = [1, 1]} : vector<22x16xf32> to vector<16x16xf32>
    %321 = vector.broadcast %97 : f32 to vector<16x16xf32>
    %322 = arith.mulf %321, %320 : vector<16x16xf32>
    %323 = vector.extract_strided_slice %279 {offsets = [5, 0], sizes = [16, 16], strides = [1, 1]} : vector<22x16xf32> to vector<16x16xf32>
    %324 = vector.broadcast %146 : f32 to vector<16x16xf32>
    %325 = arith.mulf %324, %323 : vector<16x16xf32>
    %326 = arith.addf %322, %325 : vector<16x16xf32>
    %327 = arith.addf %295, %326 : vector<16x16xf32>
    %328 = vector.extract_strided_slice %278 {offsets = [6, 0], sizes = [16, 16], strides = [1, 1]} : vector<22x16xf32> to vector<16x16xf32>
    %329 = vector.broadcast %104 : f32 to vector<16x16xf32>
    %330 = arith.mulf %329, %328 : vector<16x16xf32>
    %331 = vector.extract_strided_slice %279 {offsets = [6, 0], sizes = [16, 16], strides = [1, 1]} : vector<22x16xf32> to vector<16x16xf32>
    %332 = vector.broadcast %153 : f32 to vector<16x16xf32>
    %333 = arith.mulf %332, %331 : vector<16x16xf32>
    %334 = arith.addf %330, %333 : vector<16x16xf32>
    %335 = arith.addf %303, %334 : vector<16x16xf32>
    %336 = vector.extract_strided_slice %50 {offsets = [0, 3], sizes = [22, 16], strides = [1, 1]} : vector<22x22xf32> to vector<22x16xf32>
    %337 = vector.extract_strided_slice %59 {offsets = [0, 3], sizes = [22, 16], strides = [1, 1]} : vector<22x22xf32> to vector<22x16xf32>
    %338 = vector.extract_strided_slice %336 {offsets = [0, 0], sizes = [16, 16], strides = [1, 1]} : vector<22x16xf32> to vector<16x16xf32>
    %339 = vector.broadcast %63 : f32 to vector<16x16xf32>
    %340 = arith.mulf %339, %338 : vector<16x16xf32>
    %341 = vector.extract_strided_slice %337 {offsets = [0, 0], sizes = [16, 16], strides = [1, 1]} : vector<22x16xf32> to vector<16x16xf32>
    %342 = vector.broadcast %112 : f32 to vector<16x16xf32>
    %343 = arith.mulf %342, %341 : vector<16x16xf32>
    %344 = arith.addf %340, %343 : vector<16x16xf32>
    %345 = arith.addf %311, %344 : vector<16x16xf32>
    %346 = vector.extract_strided_slice %336 {offsets = [1, 0], sizes = [16, 16], strides = [1, 1]} : vector<22x16xf32> to vector<16x16xf32>
    %347 = vector.broadcast %70 : f32 to vector<16x16xf32>
    %348 = arith.mulf %347, %346 : vector<16x16xf32>
    %349 = vector.extract_strided_slice %337 {offsets = [1, 0], sizes = [16, 16], strides = [1, 1]} : vector<22x16xf32> to vector<16x16xf32>
    %350 = vector.broadcast %119 : f32 to vector<16x16xf32>
    %351 = arith.mulf %350, %349 : vector<16x16xf32>
    %352 = arith.addf %348, %351 : vector<16x16xf32>
    %353 = arith.addf %319, %352 : vector<16x16xf32>
    %354 = vector.extract_strided_slice %336 {offsets = [2, 0], sizes = [16, 16], strides = [1, 1]} : vector<22x16xf32> to vector<16x16xf32>
    %355 = vector.broadcast %77 : f32 to vector<16x16xf32>
    %356 = arith.mulf %355, %354 : vector<16x16xf32>
    %357 = vector.extract_strided_slice %337 {offsets = [2, 0], sizes = [16, 16], strides = [1, 1]} : vector<22x16xf32> to vector<16x16xf32>
    %358 = vector.broadcast %126 : f32 to vector<16x16xf32>
    %359 = arith.mulf %358, %357 : vector<16x16xf32>
    %360 = arith.addf %356, %359 : vector<16x16xf32>
    %361 = arith.addf %327, %360 : vector<16x16xf32>
    %362 = vector.extract_strided_slice %336 {offsets = [3, 0], sizes = [16, 16], strides = [1, 1]} : vector<22x16xf32> to vector<16x16xf32>
    %363 = vector.broadcast %84 : f32 to vector<16x16xf32>
    %364 = arith.mulf %363, %362 : vector<16x16xf32>
    %365 = vector.extract_strided_slice %337 {offsets = [3, 0], sizes = [16, 16], strides = [1, 1]} : vector<22x16xf32> to vector<16x16xf32>
    %366 = vector.broadcast %133 : f32 to vector<16x16xf32>
    %367 = arith.mulf %366, %365 : vector<16x16xf32>
    %368 = arith.addf %364, %367 : vector<16x16xf32>
    %369 = arith.addf %335, %368 : vector<16x16xf32>
    %370 = vector.extract_strided_slice %336 {offsets = [4, 0], sizes = [16, 16], strides = [1, 1]} : vector<22x16xf32> to vector<16x16xf32>
    %371 = vector.broadcast %91 : f32 to vector<16x16xf32>
    %372 = arith.mulf %371, %370 : vector<16x16xf32>
    %373 = vector.extract_strided_slice %337 {offsets = [4, 0], sizes = [16, 16], strides = [1, 1]} : vector<22x16xf32> to vector<16x16xf32>
    %374 = vector.broadcast %140 : f32 to vector<16x16xf32>
    %375 = arith.mulf %374, %373 : vector<16x16xf32>
    %376 = arith.addf %372, %375 : vector<16x16xf32>
    %377 = arith.addf %345, %376 : vector<16x16xf32>
    %378 = vector.extract_strided_slice %336 {offsets = [5, 0], sizes = [16, 16], strides = [1, 1]} : vector<22x16xf32> to vector<16x16xf32>
    %379 = vector.broadcast %98 : f32 to vector<16x16xf32>
    %380 = arith.mulf %379, %378 : vector<16x16xf32>
    %381 = vector.extract_strided_slice %337 {offsets = [5, 0], sizes = [16, 16], strides = [1, 1]} : vector<22x16xf32> to vector<16x16xf32>
    %382 = vector.broadcast %147 : f32 to vector<16x16xf32>
    %383 = arith.mulf %382, %381 : vector<16x16xf32>
    %384 = arith.addf %380, %383 : vector<16x16xf32>
    %385 = arith.addf %353, %384 : vector<16x16xf32>
    %386 = vector.extract_strided_slice %336 {offsets = [6, 0], sizes = [16, 16], strides = [1, 1]} : vector<22x16xf32> to vector<16x16xf32>
    %387 = vector.broadcast %105 : f32 to vector<16x16xf32>
    %388 = arith.mulf %387, %386 : vector<16x16xf32>
    %389 = vector.extract_strided_slice %337 {offsets = [6, 0], sizes = [16, 16], strides = [1, 1]} : vector<22x16xf32> to vector<16x16xf32>
    %390 = vector.broadcast %154 : f32 to vector<16x16xf32>
    %391 = arith.mulf %390, %389 : vector<16x16xf32>
    %392 = arith.addf %388, %391 : vector<16x16xf32>
    %393 = arith.addf %361, %392 : vector<16x16xf32>
    %394 = vector.extract_strided_slice %50 {offsets = [0, 4], sizes = [22, 16], strides = [1, 1]} : vector<22x22xf32> to vector<22x16xf32>
    %395 = vector.extract_strided_slice %59 {offsets = [0, 4], sizes = [22, 16], strides = [1, 1]} : vector<22x22xf32> to vector<22x16xf32>
    %396 = vector.extract_strided_slice %394 {offsets = [0, 0], sizes = [16, 16], strides = [1, 1]} : vector<22x16xf32> to vector<16x16xf32>
    %397 = vector.broadcast %64 : f32 to vector<16x16xf32>
    %398 = arith.mulf %397, %396 : vector<16x16xf32>
    %399 = vector.extract_strided_slice %395 {offsets = [0, 0], sizes = [16, 16], strides = [1, 1]} : vector<22x16xf32> to vector<16x16xf32>
    %400 = vector.broadcast %113 : f32 to vector<16x16xf32>
    %401 = arith.mulf %400, %399 : vector<16x16xf32>
    %402 = arith.addf %398, %401 : vector<16x16xf32>
    %403 = arith.addf %369, %402 : vector<16x16xf32>
    %404 = vector.extract_strided_slice %394 {offsets = [1, 0], sizes = [16, 16], strides = [1, 1]} : vector<22x16xf32> to vector<16x16xf32>
    %405 = vector.broadcast %71 : f32 to vector<16x16xf32>
    %406 = arith.mulf %405, %404 : vector<16x16xf32>
    %407 = vector.extract_strided_slice %395 {offsets = [1, 0], sizes = [16, 16], strides = [1, 1]} : vector<22x16xf32> to vector<16x16xf32>
    %408 = vector.broadcast %120 : f32 to vector<16x16xf32>
    %409 = arith.mulf %408, %407 : vector<16x16xf32>
    %410 = arith.addf %406, %409 : vector<16x16xf32>
    %411 = arith.addf %377, %410 : vector<16x16xf32>
    %412 = vector.extract_strided_slice %394 {offsets = [2, 0], sizes = [16, 16], strides = [1, 1]} : vector<22x16xf32> to vector<16x16xf32>
    %413 = vector.broadcast %78 : f32 to vector<16x16xf32>
    %414 = arith.mulf %413, %412 : vector<16x16xf32>
    %415 = vector.extract_strided_slice %395 {offsets = [2, 0], sizes = [16, 16], strides = [1, 1]} : vector<22x16xf32> to vector<16x16xf32>
    %416 = vector.broadcast %127 : f32 to vector<16x16xf32>
    %417 = arith.mulf %416, %415 : vector<16x16xf32>
    %418 = arith.addf %414, %417 : vector<16x16xf32>
    %419 = arith.addf %385, %418 : vector<16x16xf32>
    %420 = vector.extract_strided_slice %394 {offsets = [3, 0], sizes = [16, 16], strides = [1, 1]} : vector<22x16xf32> to vector<16x16xf32>
    %421 = vector.broadcast %85 : f32 to vector<16x16xf32>
    %422 = arith.mulf %421, %420 : vector<16x16xf32>
    %423 = vector.extract_strided_slice %395 {offsets = [3, 0], sizes = [16, 16], strides = [1, 1]} : vector<22x16xf32> to vector<16x16xf32>
    %424 = vector.broadcast %134 : f32 to vector<16x16xf32>
    %425 = arith.mulf %424, %423 : vector<16x16xf32>
    %426 = arith.addf %422, %425 : vector<16x16xf32>
    %427 = arith.addf %393, %426 : vector<16x16xf32>
    %428 = vector.extract_strided_slice %394 {offsets = [4, 0], sizes = [16, 16], strides = [1, 1]} : vector<22x16xf32> to vector<16x16xf32>
    %429 = vector.broadcast %92 : f32 to vector<16x16xf32>
    %430 = arith.mulf %429, %428 : vector<16x16xf32>
    %431 = vector.extract_strided_slice %395 {offsets = [4, 0], sizes = [16, 16], strides = [1, 1]} : vector<22x16xf32> to vector<16x16xf32>
    %432 = vector.broadcast %141 : f32 to vector<16x16xf32>
    %433 = arith.mulf %432, %431 : vector<16x16xf32>
    %434 = arith.addf %430, %433 : vector<16x16xf32>
    %435 = arith.addf %403, %434 : vector<16x16xf32>
    %436 = vector.extract_strided_slice %394 {offsets = [5, 0], sizes = [16, 16], strides = [1, 1]} : vector<22x16xf32> to vector<16x16xf32>
    %437 = vector.broadcast %99 : f32 to vector<16x16xf32>
    %438 = arith.mulf %437, %436 : vector<16x16xf32>
    %439 = vector.extract_strided_slice %395 {offsets = [5, 0], sizes = [16, 16], strides = [1, 1]} : vector<22x16xf32> to vector<16x16xf32>
    %440 = vector.broadcast %148 : f32 to vector<16x16xf32>
    %441 = arith.mulf %440, %439 : vector<16x16xf32>
    %442 = arith.addf %438, %441 : vector<16x16xf32>
    %443 = arith.addf %411, %442 : vector<16x16xf32>
    %444 = vector.extract_strided_slice %394 {offsets = [6, 0], sizes = [16, 16], strides = [1, 1]} : vector<22x16xf32> to vector<16x16xf32>
    %445 = vector.broadcast %106 : f32 to vector<16x16xf32>
    %446 = arith.mulf %445, %444 : vector<16x16xf32>
    %447 = vector.extract_strided_slice %395 {offsets = [6, 0], sizes = [16, 16], strides = [1, 1]} : vector<22x16xf32> to vector<16x16xf32>
    %448 = vector.broadcast %155 : f32 to vector<16x16xf32>
    %449 = arith.mulf %448, %447 : vector<16x16xf32>
    %450 = arith.addf %446, %449 : vector<16x16xf32>
    %451 = arith.addf %419, %450 : vector<16x16xf32>
    %452 = vector.extract_strided_slice %50 {offsets = [0, 5], sizes = [22, 16], strides = [1, 1]} : vector<22x22xf32> to vector<22x16xf32>
    %453 = vector.extract_strided_slice %59 {offsets = [0, 5], sizes = [22, 16], strides = [1, 1]} : vector<22x22xf32> to vector<22x16xf32>
    %454 = vector.extract_strided_slice %452 {offsets = [0, 0], sizes = [16, 16], strides = [1, 1]} : vector<22x16xf32> to vector<16x16xf32>
    %455 = vector.broadcast %65 : f32 to vector<16x16xf32>
    %456 = arith.mulf %455, %454 : vector<16x16xf32>
    %457 = vector.extract_strided_slice %453 {offsets = [0, 0], sizes = [16, 16], strides = [1, 1]} : vector<22x16xf32> to vector<16x16xf32>
    %458 = vector.broadcast %114 : f32 to vector<16x16xf32>
    %459 = arith.mulf %458, %457 : vector<16x16xf32>
    %460 = arith.addf %456, %459 : vector<16x16xf32>
    %461 = arith.addf %427, %460 : vector<16x16xf32>
    %462 = vector.extract_strided_slice %452 {offsets = [1, 0], sizes = [16, 16], strides = [1, 1]} : vector<22x16xf32> to vector<16x16xf32>
    %463 = vector.broadcast %72 : f32 to vector<16x16xf32>
    %464 = arith.mulf %463, %462 : vector<16x16xf32>
    %465 = vector.extract_strided_slice %453 {offsets = [1, 0], sizes = [16, 16], strides = [1, 1]} : vector<22x16xf32> to vector<16x16xf32>
    %466 = vector.broadcast %121 : f32 to vector<16x16xf32>
    %467 = arith.mulf %466, %465 : vector<16x16xf32>
    %468 = arith.addf %464, %467 : vector<16x16xf32>
    %469 = arith.addf %435, %468 : vector<16x16xf32>
    %470 = vector.extract_strided_slice %452 {offsets = [2, 0], sizes = [16, 16], strides = [1, 1]} : vector<22x16xf32> to vector<16x16xf32>
    %471 = vector.broadcast %79 : f32 to vector<16x16xf32>
    %472 = arith.mulf %471, %470 : vector<16x16xf32>
    %473 = vector.extract_strided_slice %453 {offsets = [2, 0], sizes = [16, 16], strides = [1, 1]} : vector<22x16xf32> to vector<16x16xf32>
    %474 = vector.broadcast %128 : f32 to vector<16x16xf32>
    %475 = arith.mulf %474, %473 : vector<16x16xf32>
    %476 = arith.addf %472, %475 : vector<16x16xf32>
    %477 = arith.addf %443, %476 : vector<16x16xf32>
    %478 = vector.extract_strided_slice %452 {offsets = [3, 0], sizes = [16, 16], strides = [1, 1]} : vector<22x16xf32> to vector<16x16xf32>
    %479 = vector.broadcast %86 : f32 to vector<16x16xf32>
    %480 = arith.mulf %479, %478 : vector<16x16xf32>
    %481 = vector.extract_strided_slice %453 {offsets = [3, 0], sizes = [16, 16], strides = [1, 1]} : vector<22x16xf32> to vector<16x16xf32>
    %482 = vector.broadcast %135 : f32 to vector<16x16xf32>
    %483 = arith.mulf %482, %481 : vector<16x16xf32>
    %484 = arith.addf %480, %483 : vector<16x16xf32>
    %485 = arith.addf %451, %484 : vector<16x16xf32>
    %486 = vector.extract_strided_slice %452 {offsets = [4, 0], sizes = [16, 16], strides = [1, 1]} : vector<22x16xf32> to vector<16x16xf32>
    %487 = vector.broadcast %93 : f32 to vector<16x16xf32>
    %488 = arith.mulf %487, %486 : vector<16x16xf32>
    %489 = vector.extract_strided_slice %453 {offsets = [4, 0], sizes = [16, 16], strides = [1, 1]} : vector<22x16xf32> to vector<16x16xf32>
    %490 = vector.broadcast %142 : f32 to vector<16x16xf32>
    %491 = arith.mulf %490, %489 : vector<16x16xf32>
    %492 = arith.addf %488, %491 : vector<16x16xf32>
    %493 = arith.addf %461, %492 : vector<16x16xf32>
    %494 = vector.extract_strided_slice %452 {offsets = [5, 0], sizes = [16, 16], strides = [1, 1]} : vector<22x16xf32> to vector<16x16xf32>
    %495 = vector.broadcast %100 : f32 to vector<16x16xf32>
    %496 = arith.mulf %495, %494 : vector<16x16xf32>
    %497 = vector.extract_strided_slice %453 {offsets = [5, 0], sizes = [16, 16], strides = [1, 1]} : vector<22x16xf32> to vector<16x16xf32>
    %498 = vector.broadcast %149 : f32 to vector<16x16xf32>
    %499 = arith.mulf %498, %497 : vector<16x16xf32>
    %500 = arith.addf %496, %499 : vector<16x16xf32>
    %501 = arith.addf %469, %500 : vector<16x16xf32>
    %502 = vector.extract_strided_slice %452 {offsets = [6, 0], sizes = [16, 16], strides = [1, 1]} : vector<22x16xf32> to vector<16x16xf32>
    %503 = vector.broadcast %107 : f32 to vector<16x16xf32>
    %504 = arith.mulf %503, %502 : vector<16x16xf32>
    %505 = vector.extract_strided_slice %453 {offsets = [6, 0], sizes = [16, 16], strides = [1, 1]} : vector<22x16xf32> to vector<16x16xf32>
    %506 = vector.broadcast %156 : f32 to vector<16x16xf32>
    %507 = arith.mulf %506, %505 : vector<16x16xf32>
    %508 = arith.addf %504, %507 : vector<16x16xf32>
    %509 = arith.addf %477, %508 : vector<16x16xf32>
    %510 = vector.extract_strided_slice %50 {offsets = [0, 6], sizes = [22, 16], strides = [1, 1]} : vector<22x22xf32> to vector<22x16xf32>
    %511 = vector.extract_strided_slice %59 {offsets = [0, 6], sizes = [22, 16], strides = [1, 1]} : vector<22x22xf32> to vector<22x16xf32>
    %512 = vector.extract_strided_slice %510 {offsets = [0, 0], sizes = [16, 16], strides = [1, 1]} : vector<22x16xf32> to vector<16x16xf32>
    %513 = vector.broadcast %66 : f32 to vector<16x16xf32>
    %514 = arith.mulf %513, %512 : vector<16x16xf32>
    %515 = vector.extract_strided_slice %511 {offsets = [0, 0], sizes = [16, 16], strides = [1, 1]} : vector<22x16xf32> to vector<16x16xf32>
    %516 = vector.broadcast %115 : f32 to vector<16x16xf32>
    %517 = arith.mulf %516, %515 : vector<16x16xf32>
    %518 = arith.addf %514, %517 : vector<16x16xf32>
    %519 = arith.addf %485, %518 : vector<16x16xf32>
    %520 = vector.extract_strided_slice %510 {offsets = [1, 0], sizes = [16, 16], strides = [1, 1]} : vector<22x16xf32> to vector<16x16xf32>
    %521 = vector.broadcast %73 : f32 to vector<16x16xf32>
    %522 = arith.mulf %521, %520 : vector<16x16xf32>
    %523 = vector.extract_strided_slice %511 {offsets = [1, 0], sizes = [16, 16], strides = [1, 1]} : vector<22x16xf32> to vector<16x16xf32>
    %524 = vector.broadcast %122 : f32 to vector<16x16xf32>
    %525 = arith.mulf %524, %523 : vector<16x16xf32>
    %526 = arith.addf %522, %525 : vector<16x16xf32>
    %527 = arith.addf %493, %526 : vector<16x16xf32>
    %528 = vector.extract_strided_slice %510 {offsets = [2, 0], sizes = [16, 16], strides = [1, 1]} : vector<22x16xf32> to vector<16x16xf32>
    %529 = vector.broadcast %80 : f32 to vector<16x16xf32>
    %530 = arith.mulf %529, %528 : vector<16x16xf32>
    %531 = vector.extract_strided_slice %511 {offsets = [2, 0], sizes = [16, 16], strides = [1, 1]} : vector<22x16xf32> to vector<16x16xf32>
    %532 = vector.broadcast %129 : f32 to vector<16x16xf32>
    %533 = arith.mulf %532, %531 : vector<16x16xf32>
    %534 = arith.addf %530, %533 : vector<16x16xf32>
    %535 = arith.addf %501, %534 : vector<16x16xf32>
    %536 = vector.extract_strided_slice %510 {offsets = [3, 0], sizes = [16, 16], strides = [1, 1]} : vector<22x16xf32> to vector<16x16xf32>
    %537 = vector.broadcast %87 : f32 to vector<16x16xf32>
    %538 = arith.mulf %537, %536 : vector<16x16xf32>
    %539 = vector.extract_strided_slice %511 {offsets = [3, 0], sizes = [16, 16], strides = [1, 1]} : vector<22x16xf32> to vector<16x16xf32>
    %540 = vector.broadcast %136 : f32 to vector<16x16xf32>
    %541 = arith.mulf %540, %539 : vector<16x16xf32>
    %542 = arith.addf %538, %541 : vector<16x16xf32>
    %543 = arith.addf %509, %542 : vector<16x16xf32>
    %544 = vector.extract_strided_slice %510 {offsets = [4, 0], sizes = [16, 16], strides = [1, 1]} : vector<22x16xf32> to vector<16x16xf32>
    %545 = vector.broadcast %94 : f32 to vector<16x16xf32>
    %546 = arith.mulf %545, %544 : vector<16x16xf32>
    %547 = vector.extract_strided_slice %511 {offsets = [4, 0], sizes = [16, 16], strides = [1, 1]} : vector<22x16xf32> to vector<16x16xf32>
    %548 = vector.broadcast %143 : f32 to vector<16x16xf32>
    %549 = arith.mulf %548, %547 : vector<16x16xf32>
    %550 = arith.addf %546, %549 : vector<16x16xf32>
    %551 = arith.addf %519, %550 : vector<16x16xf32>
    %552 = vector.extract_strided_slice %510 {offsets = [5, 0], sizes = [16, 16], strides = [1, 1]} : vector<22x16xf32> to vector<16x16xf32>
    %553 = vector.broadcast %101 : f32 to vector<16x16xf32>
    %554 = arith.mulf %553, %552 : vector<16x16xf32>
    %555 = vector.extract_strided_slice %511 {offsets = [5, 0], sizes = [16, 16], strides = [1, 1]} : vector<22x16xf32> to vector<16x16xf32>
    %556 = vector.broadcast %150 : f32 to vector<16x16xf32>
    %557 = arith.mulf %556, %555 : vector<16x16xf32>
    %558 = arith.addf %554, %557 : vector<16x16xf32>
    %559 = arith.addf %527, %558 : vector<16x16xf32>
    %560 = vector.extract_strided_slice %510 {offsets = [6, 0], sizes = [16, 16], strides = [1, 1]} : vector<22x16xf32> to vector<16x16xf32>
    %561 = vector.broadcast %108 : f32 to vector<16x16xf32>
    %562 = arith.mulf %561, %560 : vector<16x16xf32>
    %563 = vector.extract_strided_slice %511 {offsets = [6, 0], sizes = [16, 16], strides = [1, 1]} : vector<22x16xf32> to vector<16x16xf32>
    %564 = vector.broadcast %157 : f32 to vector<16x16xf32>
    %565 = arith.mulf %564, %563 : vector<16x16xf32>
    %566 = arith.addf %562, %565 : vector<16x16xf32>
    %567 = arith.addf %535, %566 : vector<16x16xf32>
    %568 = arith.addf %567, %543 : vector<16x16xf32>
    %569 = arith.addf %551, %559 : vector<16x16xf32>
    %570 = arith.addf %568, %569 : vector<16x16xf32>
    %571 = arith.negf %570 : vector<16x16xf32>
    %572 = math.exp %571 : vector<16x16xf32>
    %cst_10 = arith.constant 1.000000e+00 : f32
    %573 = vector.broadcast %cst_10 : f32 to vector<16x16xf32>
    %574 = arith.addf %573, %572 : vector<16x16xf32>
    %575 = arith.divf %573, %574 : vector<16x16xf32>
    %576 = vector.extract_strided_slice %575 {offsets = [0, 0], sizes = [1, 16], strides = [1, 1]} : vector<16x16xf32> to vector<1x16xf32>
    %577 = vector.extract_strided_slice %575 {offsets = [1, 0], sizes = [1, 16], strides = [1, 1]} : vector<16x16xf32> to vector<1x16xf32>
    %578 = vector.extract_strided_slice %575 {offsets = [2, 0], sizes = [1, 16], strides = [1, 1]} : vector<16x16xf32> to vector<1x16xf32>
    %579 = vector.extract_strided_slice %575 {offsets = [3, 0], sizes = [1, 16], strides = [1, 1]} : vector<16x16xf32> to vector<1x16xf32>
    %580 = vector.extract_strided_slice %575 {offsets = [4, 0], sizes = [1, 16], strides = [1, 1]} : vector<16x16xf32> to vector<1x16xf32>
    %581 = vector.extract_strided_slice %575 {offsets = [5, 0], sizes = [1, 16], strides = [1, 1]} : vector<16x16xf32> to vector<1x16xf32>
    %582 = vector.extract_strided_slice %575 {offsets = [6, 0], sizes = [1, 16], strides = [1, 1]} : vector<16x16xf32> to vector<1x16xf32>
    %583 = vector.extract_strided_slice %575 {offsets = [7, 0], sizes = [1, 16], strides = [1, 1]} : vector<16x16xf32> to vector<1x16xf32>
    %584 = vector.extract_strided_slice %575 {offsets = [8, 0], sizes = [1, 16], strides = [1, 1]} : vector<16x16xf32> to vector<1x16xf32>
    %585 = vector.extract_strided_slice %575 {offsets = [9, 0], sizes = [1, 16], strides = [1, 1]} : vector<16x16xf32> to vector<1x16xf32>
    %586 = vector.extract_strided_slice %575 {offsets = [10, 0], sizes = [1, 16], strides = [1, 1]} : vector<16x16xf32> to vector<1x16xf32>
    %587 = vector.extract_strided_slice %575 {offsets = [11, 0], sizes = [1, 16], strides = [1, 1]} : vector<16x16xf32> to vector<1x16xf32>
    %588 = vector.extract_strided_slice %575 {offsets = [12, 0], sizes = [1, 16], strides = [1, 1]} : vector<16x16xf32> to vector<1x16xf32>
    %589 = vector.extract_strided_slice %575 {offsets = [13, 0], sizes = [1, 16], strides = [1, 1]} : vector<16x16xf32> to vector<1x16xf32>
    %590 = vector.extract_strided_slice %575 {offsets = [14, 0], sizes = [1, 16], strides = [1, 1]} : vector<16x16xf32> to vector<1x16xf32>
    %591 = vector.extract_strided_slice %575 {offsets = [15, 0], sizes = [1, 16], strides = [1, 1]} : vector<16x16xf32> to vector<1x16xf32>
    %592 = tpu.concatenate %576, %577, %578, %579, %580, %581, %582, %583, %584, %585, %586, %587, %588, %589, %590, %591 in 1 : vector<1x16xf32>, vector<1x16xf32>, vector<1x16xf32>, vector<1x16xf32>, vector<1x16xf32>, vector<1x16xf32>, vector<1x16xf32>, vector<1x16xf32>, vector<1x16xf32>, vector<1x16xf32>, vector<1x16xf32>, vector<1x16xf32>, vector<1x16xf32>, vector<1x16xf32>, vector<1x16xf32>, vector<1x16xf32> -> vector<1x256xf32>
    %593 = vector.broadcast %592 : vector<1x256xf32> to vector<4x256xf32>
    %594 = arith.mulf %1, %593 : vector<4x256xf32>
    %c0_11 = arith.constant 0 : index
    %c0_12 = arith.constant 0 : index
    %c0_13 = arith.constant 0 : index
    %595 = vector.load %arg3[%c0_11, %c0_12, %c0_13] : memref<1x4x256xf32, #tpu.memory_space<vmem>>, vector<1x4x256xf32>
    %596 = vector.shape_cast %595 : vector<1x4x256xf32> to vector<4x256xf32>
    %597 = vector.shape_cast %594 : vector<4x256xf32> to vector<1x4x256xf32>
    tpu.vector_store %arg3[%c0_11, %c0_12, %c0_13], %597 {strides = array<i32>} : memref<1x4x256xf32, #tpu.memory_space<vmem>>, vector<1x4x256xf32>,
    return
  }
  func.func @transform_0(%arg0: i32) -> (i32, i32, i32) {
    %c0_i32 = arith.constant 0 : i32
    %c0_i32_0 = arith.constant 0 : i32
    %c0_i32_1 = arith.constant 0 : i32
    return %arg0, %c0_i32, %c0_i32_0 : i32, i32, i32
  }
  func.func @transform_1(%arg0: i32) -> i32 {
    %c0_i32 = arith.constant 0 : i32
    %c0_i32_0 = arith.constant 0 : i32
    return %c0_i32 : i32
  }
  func.func @transform_2(%arg0: i32) -> (i32, i32, i32) {
    %c0_i32 = arith.constant 0 : i32
    %c0_i32_0 = arith.constant 0 : i32
    %c0_i32_1 = arith.constant 0 : i32
    return %arg0, %c0_i32, %c0_i32_0 : i32, i32, i32
  }
}

</mosaic_0001>

<llo_original>
// kernel: tpu_custom_call.1
$region0: #{tpu_custom_call.1}
  #allocation0 [shape = 'u32[]', space=smem, size = 0x4, offset = 0x4, fixed_abs, tag = 'smem constant byte address 0x4 - core index']
  #allocation1 [shape = 'u32[72,128]{1,0:T(1,128)}', space=vmem, size = 0x9000, scoped, tag = 'internal scratch']
  %s0 = inlined_call_operand.hbm [shape: f32[2,4,256], index: 0, kind: input, shape index: {}]
  %s1 = inlined_call_operand.hbm [shape: f32[98], index: 1, kind: input, shape index: {}]
  %s2 = inlined_call_operand.hbm [shape: f32[2,4,256], index: 2, kind: output, shape index: {}]
  %s3 = sld [smem:[#allocation0]]
  $region49: #{tpu_custom_call.1} parent=0
    _
  %s5 = ssub.s32 1, %s3
  %s6 = scalar_select 0, %s5, %s3
  $region1: #{tpu_custom_call.1} parent=0
    #allocation2 [shape = 'u8[8192]{0}', space=vmem, size = 0x2000, scoped, tag = 'input window, operand 0']
    #allocation3 [shape = 's32[2]{0}', space=sflag, size = 0x8, scoped, tag = 'scoped memory for tpu_custom_call.1']
    #allocation4 [shape = 's32[2]{0}', space=sflag, size = 0x8, scoped, tag = 'scoped memory for tpu_custom_call.1']
    #allocation5 [shape = 's32[2]{0}', space=sflag, size = 0x8, scoped, tag = 'scoped memory for tpu_custom_call.1']
    #allocation6 [shape = 'u8[512]{0}', space=smem, size = 0x200, scoped, tag = 'input window, operand 1, single buffered']
    #allocation7 [shape = 'u8[8192]{0}', space=vmem, size = 0x2000, scoped, tag = 'output window, operand 0']
    %7 = vsyncpa [#allocation3], 0
    %s8 = scalar_lea.sflag [#allocation3], 1
    %9 = vsyncpa %s8, 0
    %10 = vsyncpa [#allocation5], 0
    %11 = vsyncpa [#allocation4], 0
    %s12 = scalar_lea.sflag [#allocation4], 1
    %13 = vsyncpa %s12, 0
    loop: start=0, step=1, limit=4
    $region2: #{tpu_custom_call.1} parent=1 // loop_pre_header
      _
    $region3: #{tpu_custom_call.1} parent=1 // loop_header
      %s15 = sphi 0, %s19
      %p16 = scmp.ge.s32.totalorder %s15, 4
      %s25 = sphi 0, %s27
      %s28 = sphi 0, %s25
      %s29 = sphi 0, %s28
      %s45 = sphi 0, %s29
      %s49 = sphi 0, %s49
      %s51 = sphi 0, %s49
      %s52 = sphi 0, %s51
      %s66 = sphi 0, %s52
      %s72 = sphi 0, %s74
      %s75 = sphi 0, %s72
      %s76 = sphi 0, %s75
      %s92 = sphi 0, %s76
    $region4: #{tpu_custom_call.1} parent=1 // loop_header_branch
      %18 = sbr.rel (%p16) target = $region8
    $region5: #{tpu_custom_call.1} parent=1 // loop_body
      %s20 = ssub.s32 %s15, 1
      %s21 = ssub.s32 %s15, 2
      %s22 = sadd.s32 %s15, 1
      %s23 = ssub.s32 %s15, %s22
      %p24 = scmp.eq.s32.totalorder %s23, 0
      %s26 = sadd.s32 %s25, 1
      %s27 = scalar_select %p24, %s25, %s26
      %p30 = pneg %p24
      %p31 = scmp.eq.s32.totalorder %s15, 1
      %p32 = por %p30, %p31
      %p33 = scmp.ne.s32.totalorder %s25, %s28
      %p34 = scmp.eq.s32.totalorder %s15, 0
      %p35 = por %p33, %p34
      %p36 = scmp.ne.s32.totalorder %s25, %s28
      %p37 = scmp.eq.s32.totalorder %s20, 1
      %p38 = por %p36, %p37
      %p39 = scmp.ne.s32.totalorder %s28, %s29
      %p40 = scmp.eq.s32.totalorder %s20, 0
      %p41 = por %p39, %p40
      %p42 = scmp.ne.s32.totalorder %s28, %s29
      %p43 = scmp.eq.s32.totalorder %s21, 1
      %p44 = por %p42, %p43
      %p46 = scmp.ne.s32.totalorder %s29, %s45
      %p47 = scmp.eq.s32.totalorder %s21, 0
      %p48 = por %p46, %p47
      %s50 = sadd.s32 %s49, 1
      %p53 = scmp.eq.s32.totalorder %s15, 1
      %p54 = scmp.ne.s32.totalorder %s49, %s51
      %p55 = scmp.eq.s32.totalorder %s15, 0
      %p56 = por %p54, %p55
      %p57 = scmp.ne.s32.totalorder %s49, %s51
      %p58 = scmp.eq.s32.totalorder %s20, 1
      %p59 = por %p57, %p58
      %p60 = scmp.ne.s32.totalorder %s51, %s52
      %p61 = scmp.eq.s32.totalorder %s20, 0
      %p62 = por %p60, %p61
      %p63 = scmp.ne.s32.totalorder %s51, %s52
      %p64 = scmp.eq.s32.totalorder %s21, 1
      %p65 = por %p63, %p64
      %p67 = scmp.ne.s32.totalorder %s52, %s66
      %p68 = scmp.eq.s32.totalorder %s21, 0
      %p69 = por %p67, %p68
      %s70 = ssub.s32 %s15, %s22
      %p71 = scmp.eq.s32.totalorder %s70, 0
      %s73 = sadd.s32 %s72, 1
      %s74 = scalar_select %p71, %s72, %s73
      %p77 = pneg %p71
      %p78 = scmp.eq.s32.totalorder %s15, 1
      %p79 = por %p77, %p78
      %p80 = scmp.ne.s32.totalorder %s72, %s75
      %p81 = scmp.eq.s32.totalorder %s15, 0
      %p82 = por %p80, %p81
      %p83 = scmp.ne.s32.totalorder %s72, %s75
      %p84 = scmp.eq.s32.totalorder %s20, 1
      %p85 = por %p83, %p84
      %p86 = scmp.ne.s32.totalorder %s75, %s76
      %p87 = scmp.eq.s32.totalorder %s20, 0
      %p88 = por %p86, %p87
      %p89 = scmp.ne.s32.totalorder %s75, %s76
      %p90 = scmp.eq.s32.totalorder %s21, 1
      %p91 = por %p89, %p90
      %p93 = scmp.ne.s32.totalorder %s76, %s92
      %p94 = scmp.eq.s32.totalorder %s21, 0
      %p95 = por %p93, %p94
      %p96 = scmp.le.s32.totalorder 1, %s15
      %p97 = scmp.lt.s32.totalorder %s15, 3
      %p98 = pnand %p96, %p97
      %p99 = pneg %p98
      // Predicated region
      $region9: #{tpu_custom_call.1} parent=5 // pred_check
        _
      $region10: #{tpu_custom_call.1} parent=5 // pred_check_branch
        %101 = sbr.rel (%p98) target = $region12
      $region11: #{tpu_custom_call.1} parent=5 // pred_region
        %s102 = ssub.s32 %s15, 1
        // Predicated region
        $region13: #{tpu_custom_call.1} parent=11 // pred_check
          %p103 = pneg %p62
        $region14: #{tpu_custom_call.1} parent=11 // pred_check_branch
          %105 = sbr.rel (%p103) target = $region16
        $region15: #{tpu_custom_call.1} parent=11 // pred_region
          %107 = vsyncadd [#allocation5], 0
          %s109 = sshll.u32 %s1, 4
          %s110 = int_to_ptr.hbm [resolvable:$true] %s109
          %112 = dma.hbm_to_smem %s110, 16, [#allocation6], [#allocation5]
        $region16: #{tpu_custom_call.1} parent=11 // pred_fallthru
          _
      $region12: #{tpu_custom_call.1} parent=5 // pred_fallthru
        _
      %p113 = scmp.lt.s32.totalorder %s15, 2
      // Predicated region
      $region17: #{tpu_custom_call.1} parent=5 // pred_check
        %p114 = pneg %p113
      $region18: #{tpu_custom_call.1} parent=5 // pred_check_branch
        %116 = sbr.rel (%p114) target = $region20
      $region19: #{tpu_custom_call.1} parent=5 // pred_region
        // Predicated region
        $region21: #{tpu_custom_call.1} parent=19 // pred_check
          %p117 = pneg %p35
        $region22: #{tpu_custom_call.1} parent=19 // pred_check_branch
          %119 = sbr.rel (%p117) target = $region24
        $region23: #{tpu_custom_call.1} parent=19 // pred_region
          %s120 = sand.u32 %s25, 1
          %s121 = scalar_lea.sflag [#allocation3], %s120
          %s122 = sand.u32 %s25, 1
          %s123 = smul.addr %s122, 8
          %s124 = scalar_lea.vmem [#allocation2], %s123
          %126 = vsyncadd %s121, 0
          %s127 = smul.addr %s15, 2
          %s128 = smul.addr %s127, 4
          %s129 = scalar_lea.hbm %s0, %s128
          %s131 = sshll.u32 %s129, 4
          %s132 = int_to_ptr.hbm [resolvable:$true] %s131
          %s133 = sshll.u32 %s124, 4
          %s134 = int_to_ptr.vmem [resolvable:$true] %s133
          %136 = dma.hbm_to_vmem [thread:$0]  %s132, 128, %s134, %s121
        $region24: #{tpu_custom_call.1} parent=19 // pred_fallthru
          _
      $region20: #{tpu_custom_call.1} parent=5 // pred_fallthru
        _
      %p137 = scmp.le.s32.totalorder 1, %s15
      %p138 = scmp.lt.s32.totalorder %s15, 3
      %p139 = pnand %p137, %p138
      %p140 = pneg %p139
      // Predicated region
      $region25: #{tpu_custom_call.1} parent=5 // pred_check
        _
      $region26: #{tpu_custom_call.1} parent=5 // pred_check_branch
        %142 = sbr.rel (%p139) target = $region28
      $region27: #{tpu_custom_call.1} parent=5 // pred_region
        %s143 = ssub.s32 %s15, 1
        %s144 = sand.u32 %s28, 1
        %s145 = scalar_lea.sflag [#allocation3], %s144
        %s146 = sand.u32 %s28, 1
        %s147 = smul.addr %s146, 8
        %s148 = scalar_lea.vmem [#allocation2], %s147
        // Predicated region
        $region29: #{tpu_custom_call.1} parent=27 // pred_check
          %p149 = pneg %p41
        $region30: #{tpu_custom_call.1} parent=27 // pred_check_branch
          %151 = sbr.rel (%p149) target = $region32
        $region31: #{tpu_custom_call.1} parent=27 // pred_region
          %153 = dma.done %s145, 128
        $region32: #{tpu_custom_call.1} parent=27 // pred_fallthru
          _
        // Predicated region
        $region33: #{tpu_custom_call.1} parent=27 // pred_check
          %p154 = pneg %p62
        $region34: #{tpu_custom_call.1} parent=27 // pred_check_branch
          %156 = sbr.rel (%p154) target = $region36
        $region35: #{tpu_custom_call.1} parent=27 // pred_region
          %158 = dma.done [#allocation5], 16
        $region36: #{tpu_custom_call.1} parent=27 // pred_fallthru
          _
        %159 = sfence
        %s160 = sand.u32 %s28, 1
        %s161 = scalar_lea.sflag [#allocation3], %s160
        %s162 = sand.u32 %s28, 1
        %s163 = smul.addr %s162, 8
        %s164 = scalar_lea.vmem [#allocation2], %s163
        %p165 = pneg %p41
        %p166 = pneg %p38
        %p167 = pneg %p62
        %p168 = pneg %p59
        %p169 = pneg %p88
        %p170 = pneg %p85
        %s171 = sand.u32 %s75, 1
        %s172 = scalar_lea.sflag [#allocation4], %s171
        %s173 = sand.u32 %s75, 1
        %s174 = smul.addr %s173, 8
        %s175 = scalar_lea.vmem [#allocation7], %s174
        %v176 = vld [vmem:[%s148] sm:$0xff]
        %178 = vst [vmem:[#allocation1] ss:$2 sm:$0xff] %v176
        %v179 = vld.sshfl [vmem:[#allocation1] sm:$0xff pattern:$0x75316420]
        %v180 = vld.sshfl [vmem:[#allocation1 + $0x8] sm:$0xff pattern:$0x75316420]
        %vm183 = vcmask 1043456
        %v184 = vsel %vm183, %v179, 0.0
        %v185 = vrot.slane %v184, 4
        %v186 = vadd.f32 %v184, %v185
        %v187 = vrot.slane %v186, 2
        %v188 = vadd.f32 %v186, %v187
        %v189 = vrot.slane %v188, 1
        %v190 = vadd.f32 %v188, %v189
        %v191 = vsel %vm183, %v180, 0.0
        %v192 = vrot.slane %v191, 4
        %v193 = vadd.f32 %v191, %v192
        %v194 = vrot.slane %v193, 2
        %v195 = vadd.f32 %v193, %v194
        %v196 = vrot.slane %v195, 1
        %v197 = vadd.f32 %v195, %v196
        %v198 = vmul.f32 %v190, 0.25
        %v199 = vmul.f32 %v197, 0.25
        %200 = vst [vmem:[#allocation1] ss:$2 sm:$0xff] %v176
        %v201 = vld.sshfl [vmem:[#allocation1] sm:$0xff pattern:$0x75316420]
        %v202 = vld.sshfl [vmem:[#allocation1 + $0x8] sm:$0xff pattern:$0x75316420]
        %v205 = vsel %vm183, %v201, -inf
        %v206 = vrot.slane %v205, 4
        %v207 = vmax.f32 %v205, %v206
        %v208 = vrot.slane %v207, 2
        %v209 = vmax.f32 %v207, %v208
        %v210 = vrot.slane %v209, 1
        %v211 = vmax.f32 %v209, %v210
        %v212 = vsel %vm183, %v202, -inf
        %v213 = vrot.slane %v212, 4
        %v214 = vmax.f32 %v212, %v213
        %v215 = vrot.slane %v214, 2
        %v216 = vmax.f32 %v214, %v215
        %v217 = vrot.slane %v216, 1
        %v218 = vmax.f32 %v216, %v217
        %220 = vrot.lane.b32.xlu0 %v198, 112
        %v221 = vpop.permute.xlu0 %220
        %223 = vrot.lane.b32.xlu0 %v198, 96
        %v224 = vpop.permute.xlu0 %223
        %226 = vrot.lane.b32.xlu0 %v198, 80
        %v227 = vpop.permute.xlu0 %226
        %229 = vrot.lane.b32.xlu0 %v198, 64
        %v230 = vpop.permute.xlu0 %229
        %232 = vrot.lane.b32.xlu0 %v198, 48
        %v233 = vpop.permute.xlu0 %232
        %235 = vrot.lane.b32.xlu0 %v198, 32
        %v236 = vpop.permute.xlu0 %235
        %238 = vrot.lane.b32.xlu0 %v198, 16
        %v239 = vpop.permute.xlu0 %238
        %242 = vrot.lane.b32.xlu0 %v199, 112
        %v243 = vpop.permute.xlu0 %242
        %245 = vrot.lane.b32.xlu0 %v199, 96
        %v246 = vpop.permute.xlu0 %245
        %248 = vrot.lane.b32.xlu0 %v199, 80
        %v249 = vpop.permute.xlu0 %248
        %251 = vrot.lane.b32.xlu0 %v199, 64
        %v252 = vpop.permute.xlu0 %251
        %254 = vrot.lane.b32.xlu0 %v199, 48
        %v255 = vpop.permute.xlu0 %254
        %257 = vrot.lane.b32.xlu0 %v199, 32
        %v258 = vpop.permute.xlu0 %257
        %260 = vrot.lane.b32.xlu0 %v199, 16
        %v261 = vpop.permute.xlu0 %260
        %vm263 = vcmask 1040384
        %v264 = vsel %vm263, %v198, %v221
        %vm265 = vcmask 1041408
        %v266 = vsel %vm265, %v264, %v224
        %vm267 = vcmask 1042432
        %v268 = vsel %vm267, %v266, %v227
        %v269 = vsel %vm183, %v268, %v230
        %vm270 = vcmask 1044480
        %v271 = vsel %vm270, %v269, %v233
        %vm272 = vcmask 1045504
        %v273 = vsel %vm272, %v271, %v236
        %vm274 = vcmask 1046528
        %v275 = vsel %vm274, %v273, %v239
        %v276 = vsel %vm263, %v199, %v243
        %v277 = vsel %vm265, %v276, %v246
        %v278 = vsel %vm267, %v277, %v249
        %v279 = vsel %vm183, %v278, %v252
        %v280 = vsel %vm270, %v279, %v255
        %v281 = vsel %vm272, %v280, %v258
        %v282 = vsel %vm274, %v281, %v261
        %284 = vrot.lane.b32.xlu0 %v211, 112
        %v285 = vpop.permute.xlu0 %284
        %287 = vrot.lane.b32.xlu0 %v211, 96
        %v288 = vpop.permute.xlu0 %287
        %290 = vrot.lane.b32.xlu0 %v211, 80
        %v291 = vpop.permute.xlu0 %290
        %293 = vrot.lane.b32.xlu0 %v211, 64
        %v294 = vpop.permute.xlu0 %293
        %296 = vrot.lane.b32.xlu0 %v211, 48
        %v297 = vpop.permute.xlu0 %296
        %299 = vrot.lane.b32.xlu0 %v211, 32
        %v300 = vpop.permute.xlu0 %299
        %302 = vrot.lane.b32.xlu0 %v211, 16
        %v303 = vpop.permute.xlu0 %302
        %306 = vrot.lane.b32.xlu0 %v218, 112
        %v307 = vpop.permute.xlu0 %306
        %309 = vrot.lane.b32.xlu0 %v218, 96
        %v310 = vpop.permute.xlu0 %309
        %312 = vrot.lane.b32.xlu0 %v218, 80
        %v313 = vpop.permute.xlu0 %312
        %315 = vrot.lane.b32.xlu0 %v218, 64
        %v316 = vpop.permute.xlu0 %315
        %318 = vrot.lane.b32.xlu0 %v218, 48
        %v319 = vpop.permute.xlu0 %318
        %321 = vrot.lane.b32.xlu0 %v218, 32
        %v322 = vpop.permute.xlu0 %321
        %324 = vrot.lane.b32.xlu0 %v218, 16
        %v325 = vpop.permute.xlu0 %324
        %v327 = vsel %vm263, %v211, %v285
        %v328 = vsel %vm265, %v327, %v288
        %v329 = vsel %vm267, %v328, %v291
        %v330 = vsel %vm183, %v329, %v294
        %v331 = vsel %vm270, %v330, %v297
        %v332 = vsel %vm272, %v331, %v300
        %v333 = vsel %vm274, %v332, %v303
        %v334 = vsel %vm263, %v218, %v307
        %v335 = vsel %vm265, %v334, %v310
        %v336 = vsel %vm267, %v335, %v313
        %v337 = vsel %vm183, %v336, %v316
        %v338 = vsel %vm270, %v337, %v319
        %v339 = vsel %vm272, %v338, %v322
        %v340 = vsel %vm274, %v339, %v325
        %v343 = vrot.slane %v275, 5
        %v344 = vrot.slane %v282, 5
        %v345 = vsel %vm267, %v343, %v344
        %v348 = vsel %vm267, 0.0, %v343
        %v349 = vsel %vm267, %v344, 0.0
        %352 = vrot.lane.b32.xlu0 %v348, 3
        %v353 = vpop.permute.xlu0 %352
        %354 = vrot.lane.b32.xlu0 %v345, 3
        %v355 = vpop.permute.xlu0 %354
        %356 = vrot.lane.b32.xlu0 %v349, 3
        %v357 = vpop.permute.xlu0 %356
        %vm361 = vcmask 23552
        %v362 = vsel %vm361, 0.0, %v353
        %v363 = vsel %vm361, 0.0, %v355
        %v364 = vsel %vm361, 0.0, %v357
        %vm365 = vcmask 154624
        %v366 = vsel %vm365, %v362, 0.0
        %v367 = vsel %vm365, %v363, 0.0
        %v368 = vsel %vm365, %v364, 0.0
        %v371 = vrot.slane %v333, 5
        %v372 = vrot.slane %v340, 5
        %v373 = vsel %vm267, %v371, %v372
        %v376 = vsel %vm267, 0.0, %v371
        %v377 = vsel %vm267, %v372, 0.0
        %380 = vrot.lane.b32.xlu0 %v376, 3
        %v381 = vpop.permute.xlu0 %380
        %382 = vrot.lane.b32.xlu0 %v373, 3
        %v383 = vpop.permute.xlu0 %382
        %384 = vrot.lane.b32.xlu0 %v377, 3
        %v385 = vpop.permute.xlu0 %384
        %v389 = vsel %vm361, 0.0, %v381
        %v390 = vsel %vm361, 0.0, %v383
        %v391 = vsel %vm361, 0.0, %v385
        %v392 = vsel %vm365, %v389, 0.0
        %v393 = vsel %vm365, %v390, 0.0
        %v394 = vsel %vm365, %v391, 0.0
        %s395 = sld [smem:[#allocation6]]
        %s396 = sld [smem:[#allocation6 + $0x1]]
        %s397 = sld [smem:[#allocation6 + $0x2]]
        %s398 = sld [smem:[#allocation6 + $0x3]]
        %s399 = sld [smem:[#allocation6 + $0x4]]
        %s400 = sld [smem:[#allocation6 + $0x5]]
        %s401 = sld [smem:[#allocation6 + $0x6]]
        %s402 = sld [smem:[#allocation6 + $0x7]]
        %s403 = sld [smem:[#allocation6 + $0x8]]
        %s404 = sld [smem:[#allocation6 + $0x9]]
        %s405 = sld [smem:[#allocation6 + $0xa]]
        %s406 = sld [smem:[#allocation6 + $0xb]]
        %s407 = sld [smem:[#allocation6 + $0xc]]
        %s408 = sld [smem:[#allocation6 + $0xd]]
        %s409 = sld [smem:[#allocation6 + $0xe]]
        %s410 = sld [smem:[#allocation6 + $0xf]]
        %s411 = sld [smem:[#allocation6 + $0x10]]
        %s412 = sld [smem:[#allocation6 + $0x11]]
        %s413 = sld [smem:[#allocation6 + $0x12]]
        %s414 = sld [smem:[#allocation6 + $0x13]]
        %s415 = sld [smem:[#allocation6 + $0x14]]
        %s416 = sld [smem:[#allocation6 + $0x15]]
        %s417 = sld [smem:[#allocation6 + $0x16]]
        %s418 = sld [smem:[#allocation6 + $0x17]]
        %s419 = sld [smem:[#allocation6 + $0x18]]
        %s420 = sld [smem:[#allocation6 + $0x19]]
        %s421 = sld [smem:[#allocation6 + $0x1a]]
        %s422 = sld [smem:[#allocation6 + $0x1b]]
        %s423 = sld [smem:[#allocation6 + $0x1c]]
        %s424 = sld [smem:[#allocation6 + $0x1d]]
        %s425 = sld [smem:[#allocation6 + $0x1e]]
        %s426 = sld [smem:[#allocation6 + $0x1f]]
        %s427 = sld [smem:[#allocation6 + $0x20]]
        %s428 = sld [smem:[#allocation6 + $0x21]]
        %s429 = sld [smem:[#allocation6 + $0x22]]
        %s430 = sld [smem:[#allocation6 + $0x23]]
        %s431 = sld [smem:[#allocation6 + $0x24]]
        %s432 = sld [smem:[#allocation6 + $0x25]]
        %s433 = sld [smem:[#allocation6 + $0x26]]
        %s434 = sld [smem:[#allocation6 + $0x27]]
        %s435 = sld [smem:[#allocation6 + $0x28]]
        %s436 = sld [smem:[#allocation6 + $0x29]]
        %s437 = sld [smem:[#allocation6 + $0x2a]]
        %s438 = sld [smem:[#allocation6 + $0x2b]]
        %s439 = sld [smem:[#allocation6 + $0x2c]]
        %s440 = sld [smem:[#allocation6 + $0x2d]]
        %s441 = sld [smem:[#allocation6 + $0x2e]]
        %s442 = sld [smem:[#allocation6 + $0x2f]]
        %s443 = sld [smem:[#allocation6 + $0x30]]
        %s444 = sld [smem:[#allocation6 + $0x31]]
        %s445 = sld [smem:[#allocation6 + $0x32]]
        %s446 = sld [smem:[#allocation6 + $0x33]]
        %s447 = sld [smem:[#allocation6 + $0x34]]
        %s448 = sld [smem:[#allocation6 + $0x35]]
        %s449 = sld [smem:[#allocation6 + $0x36]]
        %s450 = sld [smem:[#allocation6 + $0x37]]
        %s451 = sld [smem:[#allocation6 + $0x38]]
        %s452 = sld [smem:[#allocation6 + $0x39]]
        %s453 = sld [smem:[#allocation6 + $0x3a]]
        %s454 = sld [smem:[#allocation6 + $0x3b]]
        %s455 = sld [smem:[#allocation6 + $0x3c]]
        %s456 = sld [smem:[#allocation6 + $0x3d]]
        %s457 = sld [smem:[#allocation6 + $0x3e]]
        %s458 = sld [smem:[#allocation6 + $0x3f]]
        %s459 = sld [smem:[#allocation6 + $0x40]]
        %s460 = sld [smem:[#allocation6 + $0x41]]
        %s461 = sld [smem:[#allocation6 + $0x42]]
        %s462 = sld [smem:[#allocation6 + $0x43]]
        %s463 = sld [smem:[#allocation6 + $0x44]]
        %s464 = sld [smem:[#allocation6 + $0x45]]
        %s465 = sld [smem:[#allocation6 + $0x46]]
        %s466 = sld [smem:[#allocation6 + $0x47]]
        %s467 = sld [smem:[#allocation6 + $0x48]]
        %s468 = sld [smem:[#allocation6 + $0x49]]
        %s469 = sld [smem:[#allocation6 + $0x4a]]
        %s470 = sld [smem:[#allocation6 + $0x4b]]
        %s471 = sld [smem:[#allocation6 + $0x4c]]
        %s472 = sld [smem:[#allocation6 + $0x4d]]
        %s473 = sld [smem:[#allocation6 + $0x4e]]
        %s474 = sld [smem:[#allocation6 + $0x4f]]
        %s475 = sld [smem:[#allocation6 + $0x50]]
        %s476 = sld [smem:[#allocation6 + $0x51]]
        %s477 = sld [smem:[#allocation6 + $0x52]]
        %s478 = sld [smem:[#allocation6 + $0x53]]
        %s479 = sld [smem:[#allocation6 + $0x54]]
        %s480 = sld [smem:[#allocation6 + $0x55]]
        %s481 = sld [smem:[#allocation6 + $0x56]]
        %s482 = sld [smem:[#allocation6 + $0x57]]
        %s483 = sld [smem:[#allocation6 + $0x58]]
        %s484 = sld [smem:[#allocation6 + $0x59]]
        %s485 = sld [smem:[#allocation6 + $0x5a]]
        %s486 = sld [smem:[#allocation6 + $0x5b]]
        %s487 = sld [smem:[#allocation6 + $0x5c]]
        %s488 = sld [smem:[#allocation6 + $0x5d]]
        %s489 = sld [smem:[#allocation6 + $0x5e]]
        %s490 = sld [smem:[#allocation6 + $0x5f]]
        %s491 = sld [smem:[#allocation6 + $0x60]]
        %s492 = sld [smem:[#allocation6 + $0x61]]
        %v493 = vstv %s395
        %v494 = vmul.f32 %v493, %v366
        %v495 = vmul.f32 %v493, %v367
        %v496 = vstv %s444
        %v497 = vmul.f32 %v496, %v392
        %v498 = vmul.f32 %v496, %v393
        %v499 = vadd.f32 %v494, %v497
        %v500 = vadd.f32 %v495, %v498
        %v501 = vadd.f32 %v499, 0.0
        %v502 = vadd.f32 %v500, 0.0
        %v503 = vstv %s402
        %v504 = vmul.f32 %v503, %v366
        %v505 = vmul.f32 %v503, %v367
        %v506 = vmul.f32 %v503, %v368
        %v507 = vstv %s451
        %v508 = vmul.f32 %v507, %v392
        %v509 = vmul.f32 %v507, %v393
        %v510 = vmul.f32 %v507, %v394
        %v511 = vadd.f32 %v504, %v508
        %v512 = vadd.f32 %v505, %v509
        %v513 = vadd.f32 %v506, %v510
        %v514 = vadd.f32 %v511, 0.0
        %v515 = vadd.f32 %v512, 0.0
        %v516 = vadd.f32 %v513, 0.0
        %v517 = vstv %s409
        %v518 = vmul.f32 %v517, %v366
        %v519 = vmul.f32 %v517, %v367
        %v520 = vmul.f32 %v517, %v368
        %v521 = vstv %s458
        %v522 = vmul.f32 %v521, %v392
        %v523 = vmul.f32 %v521, %v393
        %v524 = vmul.f32 %v521, %v394
        %v525 = vadd.f32 %v518, %v522
        %v526 = vadd.f32 %v519, %v523
        %v527 = vadd.f32 %v520, %v524
        %v528 = vadd.f32 %v525, 0.0
        %v529 = vadd.f32 %v526, 0.0
        %v530 = vadd.f32 %v527, 0.0
        %v531 = vstv %s416
        %v532 = vmul.f32 %v531, %v366
        %v533 = vmul.f32 %v531, %v367
        %v534 = vmul.f32 %v531, %v368
        %v535 = vstv %s465
        %v536 = vmul.f32 %v535, %v392
        %v537 = vmul.f32 %v535, %v393
        %v538 = vmul.f32 %v535, %v394
        %v539 = vadd.f32 %v532, %v536
        %v540 = vadd.f32 %v533, %v537
        %v541 = vadd.f32 %v534, %v538
        %v542 = vadd.f32 %v539, 0.0
        %v543 = vadd.f32 %v540, 0.0
        %v544 = vadd.f32 %v541, 0.0
        %v545 = vstv %s423
        %v546 = vmul.f32 %v545, %v366
        %v547 = vmul.f32 %v545, %v367
        %v548 = vmul.f32 %v545, %v368
        %v549 = vstv %s472
        %v550 = vmul.f32 %v549, %v392
        %v551 = vmul.f32 %v549, %v393
        %v552 = vmul.f32 %v549, %v394
        %v553 = vadd.f32 %v546, %v550
        %v554 = vadd.f32 %v547, %v551
        %v555 = vadd.f32 %v548, %v552
        %v559 = vrot.slane %v553, 4
        %v560 = vrot.slane %v554, 4
        %v561 = vsel %vm183, %v559, %v560
        %v562 = vrot.slane %v555, 4
        %v563 = vsel %vm183, %v560, %v562
        %v566 = vadd.f32 %v501, %v561
        %v567 = vadd.f32 %v502, %v563
        %v568 = vstv %s430
        %v569 = vmul.f32 %v568, %v366
        %v570 = vmul.f32 %v568, %v367
        %v571 = vmul.f32 %v568, %v368
        %v572 = vstv %s479
        %v573 = vmul.f32 %v572, %v392
        %v574 = vmul.f32 %v572, %v393
        %v575 = vmul.f32 %v572, %v394
        %v576 = vadd.f32 %v569, %v573
        %v577 = vadd.f32 %v570, %v574
        %v578 = vadd.f32 %v571, %v575
        %v582 = vrot.slane %v576, 4
        %v583 = vrot.slane %v577, 4
        %v584 = vsel %vm183, %v582, %v583
        %v585 = vrot.slane %v578, 4
        %v586 = vsel %vm183, %v583, %v585
        %v590 = vadd.f32 %v514, %v584
        %v591 = vadd.f32 %v515, %v586
        %v592 = vadd.f32 %v516, %v585
        %v593 = vstv %s437
        %v594 = vmul.f32 %v593, %v366
        %v595 = vmul.f32 %v593, %v367
        %v596 = vmul.f32 %v593, %v368
        %v597 = vstv %s486
        %v598 = vmul.f32 %v597, %v392
        %v599 = vmul.f32 %v597, %v393
        %v600 = vmul.f32 %v597, %v394
        %v601 = vadd.f32 %v594, %v598
        %v602 = vadd.f32 %v595, %v599
        %v603 = vadd.f32 %v596, %v600
        %v607 = vrot.slane %v601, 4
        %v608 = vrot.slane %v602, 4
        %v609 = vsel %vm183, %v607, %v608
        %v610 = vrot.slane %v603, 4
        %v611 = vsel %vm183, %v608, %v610
        %v615 = vadd.f32 %v528, %v609
        %v616 = vadd.f32 %v529, %v611
        %v617 = vadd.f32 %v530, %v610
        %v618 = vstv %s396
        %v619 = vmul.f32 %v618, %v366
        %v620 = vmul.f32 %v618, %v367
        %v621 = vstv %s445
        %v622 = vmul.f32 %v621, %v392
        %v623 = vmul.f32 %v621, %v393
        %v624 = vadd.f32 %v619, %v622
        %v625 = vadd.f32 %v620, %v623
        %v628 = vrot.slane %v624, 5
        %v629 = vrot.slane %v625, 5
        %v630 = vsel %vm267, %v628, %v629
        %631 = vrot.lane.b32.xlu0 %v628, 127
        %v632 = vpop.permute.xlu0 %631
        %633 = vrot.lane.b32.xlu0 %v630, 127
        %v634 = vpop.permute.xlu0 %633
        %635 = vrot.lane.b32.xlu0 %v629, 127
        %v636 = vpop.permute.xlu0 %635
        %v640 = vadd.f32 %v542, %v632
        %v641 = vadd.f32 %v543, %v634
        %v642 = vadd.f32 %v544, %v636
        %v643 = vstv %s403
        %v644 = vmul.f32 %v643, %v366
        %v645 = vmul.f32 %v643, %v367
        %v646 = vmul.f32 %v643, %v368
        %v647 = vstv %s452
        %v648 = vmul.f32 %v647, %v392
        %v649 = vmul.f32 %v647, %v393
        %v650 = vmul.f32 %v647, %v394
        %v651 = vadd.f32 %v644, %v648
        %v652 = vadd.f32 %v645, %v649
        %v653 = vadd.f32 %v646, %v650
        %v657 = vrot.slane %v651, 1
        %v658 = vrot.slane %v652, 1
        %v659 = vsel %vm274, %v657, %v658
        %v660 = vrot.slane %v653, 1
        %v661 = vsel %vm274, %v658, %v660
        %662 = vrot.lane.b32.xlu0 %v659, 127
        %v663 = vpop.permute.xlu0 %662
        %664 = vrot.lane.b32.xlu0 %v661, 127
        %v665 = vpop.permute.xlu0 %664
        %v668 = vadd.f32 %v566, %v663
        %v669 = vadd.f32 %v567, %v665
        %v670 = vstv %s410
        %v671 = vmul.f32 %v670, %v366
        %v672 = vmul.f32 %v670, %v367
        %v673 = vmul.f32 %v670, %v368
        %v674 = vstv %s459
        %v675 = vmul.f32 %v674, %v392
        %v676 = vmul.f32 %v674, %v393
        %v677 = vmul.f32 %v674, %v394
        %v678 = vadd.f32 %v671, %v675
        %v679 = vadd.f32 %v672, %v676
        %v680 = vadd.f32 %v673, %v677
        %v684 = vrot.slane %v678, 1
        %v685 = vrot.slane %v679, 1
        %v686 = vsel %vm274, %v684, %v685
        %v687 = vrot.slane %v680, 1
        %v688 = vsel %vm274, %v685, %v687
        %689 = vrot.lane.b32.xlu0 %v686, 127
        %v690 = vpop.permute.xlu0 %689
        %691 = vrot.lane.b32.xlu0 %v688, 127
        %v692 = vpop.permute.xlu0 %691
        %693 = vrot.lane.b32.xlu0 %v687, 127
        %v694 = vpop.permute.xlu0 %693
        %v698 = vadd.f32 %v590, %v690
        %v699 = vadd.f32 %v591, %v692
        %v700 = vadd.f32 %v592, %v694
        %v701 = vstv %s417
        %v702 = vmul.f32 %v701, %v366
        %v703 = vmul.f32 %v701, %v367
        %v704 = vmul.f32 %v701, %v368
        %v705 = vstv %s466
        %v706 = vmul.f32 %v705, %v392
        %v707 = vmul.f32 %v705, %v393
        %v708 = vmul.f32 %v705, %v394
        %v709 = vadd.f32 %v702, %v706
        %v710 = vadd.f32 %v703, %v707
        %v711 = vadd.f32 %v704, %v708
        %v715 = vrot.slane %v709, 1
        %v716 = vrot.slane %v710, 1
        %v717 = vsel %vm274, %v715, %v716
        %v718 = vrot.slane %v711, 1
        %v719 = vsel %vm274, %v716, %v718
        %720 = vrot.lane.b32.xlu0 %v717, 127
        %v721 = vpop.permute.xlu0 %720
        %722 = vrot.lane.b32.xlu0 %v719, 127
        %v723 = vpop.permute.xlu0 %722
        %724 = vrot.lane.b32.xlu0 %v718, 127
        %v725 = vpop.permute.xlu0 %724
        %v729 = vadd.f32 %v615, %v721
        %v730 = vadd.f32 %v616, %v723
        %v731 = vadd.f32 %v617, %v725
        %v732 = vstv %s424
        %v733 = vmul.f32 %v732, %v366
        %v734 = vmul.f32 %v732, %v367
        %v735 = vmul.f32 %v732, %v368
        %v736 = vstv %s473
        %v737 = vmul.f32 %v736, %v392
        %v738 = vmul.f32 %v736, %v393
        %v739 = vmul.f32 %v736, %v394
        %v740 = vadd.f32 %v733, %v737
        %v741 = vadd.f32 %v734, %v738
        %v742 = vadd.f32 %v735, %v739
        %v746 = vrot.slane %v740, 1
        %v747 = vrot.slane %v741, 1
        %v748 = vsel %vm274, %v746, %v747
        %v749 = vrot.slane %v742, 1
        %v750 = vsel %vm274, %v747, %v749
        %751 = vrot.lane.b32.xlu0 %v748, 127
        %v752 = vpop.permute.xlu0 %751
        %753 = vrot.lane.b32.xlu0 %v750, 127
        %v754 = vpop.permute.xlu0 %753
        %755 = vrot.lane.b32.xlu0 %v749, 127
        %v756 = vpop.permute.xlu0 %755
        %v760 = vadd.f32 %v640, %v752
        %v761 = vadd.f32 %v641, %v754
        %v762 = vadd.f32 %v642, %v756
        %v763 = vstv %s431
        %v764 = vmul.f32 %v763, %v366
        %v765 = vmul.f32 %v763, %v367
        %v766 = vmul.f32 %v763, %v368
        %v767 = vstv %s480
        %v768 = vmul.f32 %v767, %v392
        %v769 = vmul.f32 %v767, %v393
        %v770 = vmul.f32 %v767, %v394
        %v771 = vadd.f32 %v764, %v768
        %v772 = vadd.f32 %v765, %v769
        %v773 = vadd.f32 %v766, %v770
        %v777 = vrot.slane %v771, 5
        %v778 = vrot.slane %v772, 5
        %v779 = vsel %vm267, %v777, %v778
        %v780 = vrot.slane %v773, 5
        %v781 = vsel %vm267, %v778, %v780
        %782 = vrot.lane.b32.xlu0 %v779, 127
        %v783 = vpop.permute.xlu0 %782
        %784 = vrot.lane.b32.xlu0 %v781, 127
        %v785 = vpop.permute.xlu0 %784
        %v788 = vadd.f32 %v668, %v783
        %v789 = vadd.f32 %v669, %v785
        %v790 = vstv %s438
        %v791 = vmul.f32 %v790, %v366
        %v792 = vmul.f32 %v790, %v367
        %v793 = vmul.f32 %v790, %v368
        %v794 = vstv %s487
        %v795 = vmul.f32 %v794, %v392
        %v796 = vmul.f32 %v794, %v393
        %v797 = vmul.f32 %v794, %v394
        %v798 = vadd.f32 %v791, %v795
        %v799 = vadd.f32 %v792, %v796
        %v800 = vadd.f32 %v793, %v797
        %v804 = vrot.slane %v798, 5
        %v805 = vrot.slane %v799, 5
        %v806 = vsel %vm267, %v804, %v805
        %v807 = vrot.slane %v800, 5
        %v808 = vsel %vm267, %v805, %v807
        %809 = vrot.lane.b32.xlu0 %v806, 127
        %v810 = vpop.permute.xlu0 %809
        %811 = vrot.lane.b32.xlu0 %v808, 127
        %v812 = vpop.permute.xlu0 %811
        %813 = vrot.lane.b32.xlu0 %v807, 127
        %v814 = vpop.permute.xlu0 %813
        %v818 = vadd.f32 %v698, %v810
        %v819 = vadd.f32 %v699, %v812
        %v820 = vadd.f32 %v700, %v814
        %v821 = vstv %s397
        %v822 = vmul.f32 %v821, %v366
        %v823 = vmul.f32 %v821, %v367
        %v824 = vstv %s446
        %v825 = vmul.f32 %v824, %v392
        %v826 = vmul.f32 %v824, %v393
        %v827 = vadd.f32 %v822, %v825
        %v828 = vadd.f32 %v823, %v826
        %v831 = vrot.slane %v827, 6
        %v832 = vrot.slane %v828, 6
        %v833 = vsel %vm265, %v831, %v832
        %834 = vrot.lane.b32.xlu0 %v831, 126
        %v835 = vpop.permute.xlu0 %834
        %836 = vrot.lane.b32.xlu0 %v833, 126
        %v837 = vpop.permute.xlu0 %836
        %838 = vrot.lane.b32.xlu0 %v832, 126
        %v839 = vpop.permute.xlu0 %838
        %v843 = vadd.f32 %v729, %v835
        %v844 = vadd.f32 %v730, %v837
        %v845 = vadd.f32 %v731, %v839
        %v846 = vstv %s404
        %v847 = vmul.f32 %v846, %v366
        %v848 = vmul.f32 %v846, %v367
        %v849 = vmul.f32 %v846, %v368
        %v850 = vstv %s453
        %v851 = vmul.f32 %v850, %v392
        %v852 = vmul.f32 %v850, %v393
        %v853 = vmul.f32 %v850, %v394
        %v854 = vadd.f32 %v847, %v851
        %v855 = vadd.f32 %v848, %v852
        %v856 = vadd.f32 %v849, %v853
        %v860 = vrot.slane %v854, 6
        %v861 = vrot.slane %v855, 6
        %v862 = vsel %vm265, %v860, %v861
        %v863 = vrot.slane %v856, 6
        %v864 = vsel %vm265, %v861, %v863
        %865 = vrot.lane.b32.xlu0 %v860, 126
        %v866 = vpop.permute.xlu0 %865
        %867 = vrot.lane.b32.xlu0 %v862, 126
        %v868 = vpop.permute.xlu0 %867
        %869 = vrot.lane.b32.xlu0 %v864, 126
        %v870 = vpop.permute.xlu0 %869
        %v874 = vadd.f32 %v760, %v866
        %v875 = vadd.f32 %v761, %v868
        %v876 = vadd.f32 %v762, %v870
        %v877 = vstv %s411
        %v878 = vmul.f32 %v877, %v366
        %v879 = vmul.f32 %v877, %v367
        %v880 = vmul.f32 %v877, %v368
        %v881 = vstv %s460
        %v882 = vmul.f32 %v881, %v392
        %v883 = vmul.f32 %v881, %v393
        %v884 = vmul.f32 %v881, %v394
        %v885 = vadd.f32 %v878, %v882
        %v886 = vadd.f32 %v879, %v883
        %v887 = vadd.f32 %v880, %v884
        %v891 = vrot.slane %v885, 2
        %v892 = vrot.slane %v886, 2
        %v893 = vsel %vm272, %v891, %v892
        %v894 = vrot.slane %v887, 2
        %v895 = vsel %vm272, %v892, %v894
        %896 = vrot.lane.b32.xlu0 %v893, 126
        %v897 = vpop.permute.xlu0 %896
        %898 = vrot.lane.b32.xlu0 %v895, 126
        %v899 = vpop.permute.xlu0 %898
        %v902 = vadd.f32 %v788, %v897
        %v903 = vadd.f32 %v789, %v899
        %v904 = vstv %s418
        %v905 = vmul.f32 %v904, %v366
        %v906 = vmul.f32 %v904, %v367
        %v907 = vmul.f32 %v904, %v368
        %v908 = vstv %s467
        %v909 = vmul.f32 %v908, %v392
        %v910 = vmul.f32 %v908, %v393
        %v911 = vmul.f32 %v908, %v394
        %v912 = vadd.f32 %v905, %v909
        %v913 = vadd.f32 %v906, %v910
        %v914 = vadd.f32 %v907, %v911
        %v918 = vrot.slane %v912, 2
        %v919 = vrot.slane %v913, 2
        %v920 = vsel %vm272, %v918, %v919
        %v921 = vrot.slane %v914, 2
        %v922 = vsel %vm272, %v919, %v921
        %923 = vrot.lane.b32.xlu0 %v920, 126
        %v924 = vpop.permute.xlu0 %923
        %925 = vrot.lane.b32.xlu0 %v922, 126
        %v926 = vpop.permute.xlu0 %925
        %927 = vrot.lane.b32.xlu0 %v921, 126
        %v928 = vpop.permute.xlu0 %927
        %v932 = vadd.f32 %v818, %v924
        %v933 = vadd.f32 %v819, %v926
        %v934 = vadd.f32 %v820, %v928
        %v935 = vstv %s425
        %v936 = vmul.f32 %v935, %v366
        %v937 = vmul.f32 %v935, %v367
        %v938 = vmul.f32 %v935, %v368
        %v939 = vstv %s474
        %v940 = vmul.f32 %v939, %v392
        %v941 = vmul.f32 %v939, %v393
        %v942 = vmul.f32 %v939, %v394
        %v943 = vadd.f32 %v936, %v940
        %v944 = vadd.f32 %v937, %v941
        %v945 = vadd.f32 %v938, %v942
        %v949 = vrot.slane %v943, 2
        %v950 = vrot.slane %v944, 2
        %v951 = vsel %vm272, %v949, %v950
        %v952 = vrot.slane %v945, 2
        %v953 = vsel %vm272, %v950, %v952
        %954 = vrot.lane.b32.xlu0 %v951, 126
        %v955 = vpop.permute.xlu0 %954
        %956 = vrot.lane.b32.xlu0 %v953, 126
        %v957 = vpop.permute.xlu0 %956
        %958 = vrot.lane.b32.xlu0 %v952, 126
        %v959 = vpop.permute.xlu0 %958
        %v963 = vadd.f32 %v843, %v955
        %v964 = vadd.f32 %v844, %v957
        %v965 = vadd.f32 %v845, %v959
        %v966 = vstv %s432
        %v967 = vmul.f32 %v966, %v366
        %v968 = vmul.f32 %v966, %v367
        %v969 = vmul.f32 %v966, %v368
        %v970 = vstv %s481
        %v971 = vmul.f32 %v970, %v392
        %v972 = vmul.f32 %v970, %v393
        %v973 = vmul.f32 %v970, %v394
        %v974 = vadd.f32 %v967, %v971
        %v975 = vadd.f32 %v968, %v972
        %v976 = vadd.f32 %v969, %v973
        %v980 = vrot.slane %v974, 2
        %v981 = vrot.slane %v975, 2
        %v982 = vsel %vm272, %v980, %v981
        %v983 = vrot.slane %v976, 2
        %v984 = vsel %vm272, %v981, %v983
        %985 = vrot.lane.b32.xlu0 %v982, 126
        %v986 = vpop.permute.xlu0 %985
        %987 = vrot.lane.b32.xlu0 %v984, 126
        %v988 = vpop.permute.xlu0 %987
        %989 = vrot.lane.b32.xlu0 %v983, 126
        %v990 = vpop.permute.xlu0 %989
        %v994 = vadd.f32 %v874, %v986
        %v995 = vadd.f32 %v875, %v988
        %v996 = vadd.f32 %v876, %v990
        %v997 = vstv %s439
        %v998 = vmul.f32 %v997, %v366
        %v999 = vmul.f32 %v997, %v367
        %v1000 = vmul.f32 %v997, %v368
        %v1001 = vstv %s488
        %v1002 = vmul.f32 %v1001, %v392
        %v1003 = vmul.f32 %v1001, %v393
        %v1004 = vmul.f32 %v1001, %v394
        %v1005 = vadd.f32 %v998, %v1002
        %v1006 = vadd.f32 %v999, %v1003
        %v1007 = vadd.f32 %v1000, %v1004
        %v1011 = vrot.slane %v1005, 6
        %v1012 = vrot.slane %v1006, 6
        %v1013 = vsel %vm265, %v1011, %v1012
        %v1014 = vrot.slane %v1007, 6
        %v1015 = vsel %vm265, %v1012, %v1014
        %1016 = vrot.lane.b32.xlu0 %v1013, 126
        %v1017 = vpop.permute.xlu0 %1016
        %1018 = vrot.lane.b32.xlu0 %v1015, 126
        %v1019 = vpop.permute.xlu0 %1018
        %v1022 = vadd.f32 %v902, %v1017
        %v1023 = vadd.f32 %v903, %v1019
        %v1024 = vstv %s398
        %v1025 = vmul.f32 %v1024, %v366
        %v1026 = vmul.f32 %v1024, %v367
        %v1027 = vstv %s447
        %v1028 = vmul.f32 %v1027, %v392
        %v1029 = vmul.f32 %v1027, %v393
        %v1030 = vadd.f32 %v1025, %v1028
        %v1031 = vadd.f32 %v1026, %v1029
        %v1034 = vrot.slane %v1030, 7
        %v1035 = vrot.slane %v1031, 7
        %v1036 = vsel %vm263, %v1034, %v1035
        %1037 = vrot.lane.b32.xlu0 %v1034, 125
        %v1038 = vpop.permute.xlu0 %1037
        %1039 = vrot.lane.b32.xlu0 %v1036, 125
        %v1040 = vpop.permute.xlu0 %1039
        %1041 = vrot.lane.b32.xlu0 %v1035, 125
        %v1042 = vpop.permute.xlu0 %1041
        %v1046 = vadd.f32 %v932, %v1038
        %v1047 = vadd.f32 %v933, %v1040
        %v1048 = vadd.f32 %v934, %v1042
        %v1049 = vstv %s405
        %v1050 = vmul.f32 %v1049, %v366
        %v1051 = vmul.f32 %v1049, %v367
        %v1052 = vmul.f32 %v1049, %v368
        %v1053 = vstv %s454
        %v1054 = vmul.f32 %v1053, %v392
        %v1055 = vmul.f32 %v1053, %v393
        %v1056 = vmul.f32 %v1053, %v394
        %v1057 = vadd.f32 %v1050, %v1054
        %v1058 = vadd.f32 %v1051, %v1055
        %v1059 = vadd.f32 %v1052, %v1056
        %v1063 = vrot.slane %v1057, 7
        %v1064 = vrot.slane %v1058, 7
        %v1065 = vsel %vm263, %v1063, %v1064
        %v1066 = vrot.slane %v1059, 7
        %v1067 = vsel %vm263, %v1064, %v1066
        %1068 = vrot.lane.b32.xlu0 %v1063, 125
        %v1069 = vpop.permute.xlu0 %1068
        %1070 = vrot.lane.b32.xlu0 %v1065, 125
        %v1071 = vpop.permute.xlu0 %1070
        %1072 = vrot.lane.b32.xlu0 %v1067, 125
        %v1073 = vpop.permute.xlu0 %1072
        %v1077 = vadd.f32 %v963, %v1069
        %v1078 = vadd.f32 %v964, %v1071
        %v1079 = vadd.f32 %v965, %v1073
        %v1080 = vstv %s412
        %v1081 = vmul.f32 %v1080, %v366
        %v1082 = vmul.f32 %v1080, %v367
        %v1083 = vmul.f32 %v1080, %v368
        %v1084 = vstv %s461
        %v1085 = vmul.f32 %v1084, %v392
        %v1086 = vmul.f32 %v1084, %v393
        %v1087 = vmul.f32 %v1084, %v394
        %v1088 = vadd.f32 %v1081, %v1085
        %v1089 = vadd.f32 %v1082, %v1086
        %v1090 = vadd.f32 %v1083, %v1087
        %v1094 = vrot.slane %v1088, 7
        %v1095 = vrot.slane %v1089, 7
        %v1096 = vsel %vm263, %v1094, %v1095
        %v1097 = vrot.slane %v1090, 7
        %v1098 = vsel %vm263, %v1095, %v1097
        %1099 = vrot.lane.b32.xlu0 %v1094, 125
        %v1100 = vpop.permute.xlu0 %1099
        %1101 = vrot.lane.b32.xlu0 %v1096, 125
        %v1102 = vpop.permute.xlu0 %1101
        %1103 = vrot.lane.b32.xlu0 %v1098, 125
        %v1104 = vpop.permute.xlu0 %1103
        %v1108 = vadd.f32 %v994, %v1100
        %v1109 = vadd.f32 %v995, %v1102
        %v1110 = vadd.f32 %v996, %v1104
        %v1111 = vstv %s419
        %v1112 = vmul.f32 %v1111, %v366
        %v1113 = vmul.f32 %v1111, %v367
        %v1114 = vmul.f32 %v1111, %v368
        %v1115 = vstv %s468
        %v1116 = vmul.f32 %v1115, %v392
        %v1117 = vmul.f32 %v1115, %v393
        %v1118 = vmul.f32 %v1115, %v394
        %v1119 = vadd.f32 %v1112, %v1116
        %v1120 = vadd.f32 %v1113, %v1117
        %v1121 = vadd.f32 %v1114, %v1118
        %v1125 = vrot.slane %v1119, 3
        %v1126 = vrot.slane %v1120, 3
        %v1127 = vsel %vm270, %v1125, %v1126
        %v1128 = vrot.slane %v1121, 3
        %v1129 = vsel %vm270, %v1126, %v1128
        %1130 = vrot.lane.b32.xlu0 %v1127, 125
        %v1131 = vpop.permute.xlu0 %1130
        %1132 = vrot.lane.b32.xlu0 %v1129, 125
        %v1133 = vpop.permute.xlu0 %1132
        %v1136 = vadd.f32 %v1022, %v1131
        %v1137 = vadd.f32 %v1023, %v1133
        %v1138 = vstv %s426
        %v1139 = vmul.f32 %v1138, %v366
        %v1140 = vmul.f32 %v1138, %v367
        %v1141 = vmul.f32 %v1138, %v368
        %v1142 = vstv %s475
        %v1143 = vmul.f32 %v1142, %v392
        %v1144 = vmul.f32 %v1142, %v393
        %v1145 = vmul.f32 %v1142, %v394
        %v1146 = vadd.f32 %v1139, %v1143
        %v1147 = vadd.f32 %v1140, %v1144
        %v1148 = vadd.f32 %v1141, %v1145
        %v1152 = vrot.slane %v1146, 3
        %v1153 = vrot.slane %v1147, 3
        %v1154 = vsel %vm270, %v1152, %v1153
        %v1155 = vrot.slane %v1148, 3
        %v1156 = vsel %vm270, %v1153, %v1155
        %1157 = vrot.lane.b32.xlu0 %v1154, 125
        %v1158 = vpop.permute.xlu0 %1157
        %1159 = vrot.lane.b32.xlu0 %v1156, 125
        %v1160 = vpop.permute.xlu0 %1159
        %1161 = vrot.lane.b32.xlu0 %v1155, 125
        %v1162 = vpop.permute.xlu0 %1161
        %v1166 = vadd.f32 %v1046, %v1158
        %v1167 = vadd.f32 %v1047, %v1160
        %v1168 = vadd.f32 %v1048, %v1162
        %v1169 = vstv %s433
        %v1170 = vmul.f32 %v1169, %v366
        %v1171 = vmul.f32 %v1169, %v367
        %v1172 = vmul.f32 %v1169, %v368
        %v1173 = vstv %s482
        %v1174 = vmul.f32 %v1173, %v392
        %v1175 = vmul.f32 %v1173, %v393
        %v1176 = vmul.f32 %v1173, %v394
        %v1177 = vadd.f32 %v1170, %v1174
        %v1178 = vadd.f32 %v1171, %v1175
        %v1179 = vadd.f32 %v1172, %v1176
        %v1183 = vrot.slane %v1177, 3
        %v1184 = vrot.slane %v1178, 3
        %v1185 = vsel %vm270, %v1183, %v1184
        %v1186 = vrot.slane %v1179, 3
        %v1187 = vsel %vm270, %v1184, %v1186
        %1188 = vrot.lane.b32.xlu0 %v1185, 125
        %v1189 = vpop.permute.xlu0 %1188
        %1190 = vrot.lane.b32.xlu0 %v1187, 125
        %v1191 = vpop.permute.xlu0 %1190
        %1192 = vrot.lane.b32.xlu0 %v1186, 125
        %v1193 = vpop.permute.xlu0 %1192
        %v1197 = vadd.f32 %v1077, %v1189
        %v1198 = vadd.f32 %v1078, %v1191
        %v1199 = vadd.f32 %v1079, %v1193
        %v1200 = vstv %s440
        %v1201 = vmul.f32 %v1200, %v366
        %v1202 = vmul.f32 %v1200, %v367
        %v1203 = vmul.f32 %v1200, %v368
        %v1204 = vstv %s489
        %v1205 = vmul.f32 %v1204, %v392
        %v1206 = vmul.f32 %v1204, %v393
        %v1207 = vmul.f32 %v1204, %v394
        %v1208 = vadd.f32 %v1201, %v1205
        %v1209 = vadd.f32 %v1202, %v1206
        %v1210 = vadd.f32 %v1203, %v1207
        %v1214 = vrot.slane %v1208, 3
        %v1215 = vrot.slane %v1209, 3
        %v1216 = vsel %vm270, %v1214, %v1215
        %v1217 = vrot.slane %v1210, 3
        %v1218 = vsel %vm270, %v1215, %v1217
        %1219 = vrot.lane.b32.xlu0 %v1216, 125
        %v1220 = vpop.permute.xlu0 %1219
        %1221 = vrot.lane.b32.xlu0 %v1218, 125
        %v1222 = vpop.permute.xlu0 %1221
        %1223 = vrot.lane.b32.xlu0 %v1217, 125
        %v1224 = vpop.permute.xlu0 %1223
        %v1228 = vadd.f32 %v1108, %v1220
        %v1229 = vadd.f32 %v1109, %v1222
        %v1230 = vadd.f32 %v1110, %v1224
        %v1231 = vstv %s399
        %v1232 = vmul.f32 %v1231, %v366
        %v1233 = vmul.f32 %v1231, %v367
        %v1234 = vstv %s448
        %v1235 = vmul.f32 %v1234, %v392
        %v1236 = vmul.f32 %v1234, %v393
        %v1237 = vadd.f32 %v1232, %v1235
        %v1238 = vadd.f32 %v1233, %v1236
        %1241 = vrot.lane.b32.xlu0 %v1237, 124
        %v1242 = vpop.permute.xlu0 %1241
        %1243 = vrot.lane.b32.xlu0 %v1238, 124
        %v1244 = vpop.permute.xlu0 %1243
        %v1247 = vadd.f32 %v1136, %v1242
        %v1248 = vadd.f32 %v1137, %v1244
        %v1249 = vstv %s406
        %v1250 = vmul.f32 %v1249, %v366
        %v1251 = vmul.f32 %v1249, %v367
        %v1252 = vmul.f32 %v1249, %v368
        %v1253 = vstv %s455
        %v1254 = vmul.f32 %v1253, %v392
        %v1255 = vmul.f32 %v1253, %v393
        %v1256 = vmul.f32 %v1253, %v394
        %v1257 = vadd.f32 %v1250, %v1254
        %v1258 = vadd.f32 %v1251, %v1255
        %v1259 = vadd.f32 %v1252, %v1256
        %1263 = vrot.lane.b32.xlu0 %v1257, 124
        %v1264 = vpop.permute.xlu0 %1263
        %1265 = vrot.lane.b32.xlu0 %v1258, 124
        %v1266 = vpop.permute.xlu0 %1265
        %1267 = vrot.lane.b32.xlu0 %v1259, 124
        %v1268 = vpop.permute.xlu0 %1267
        %v1272 = vadd.f32 %v1166, %v1264
        %v1273 = vadd.f32 %v1167, %v1266
        %v1274 = vadd.f32 %v1168, %v1268
        %v1275 = vstv %s413
        %v1276 = vmul.f32 %v1275, %v366
        %v1277 = vmul.f32 %v1275, %v367
        %v1278 = vmul.f32 %v1275, %v368
        %v1279 = vstv %s462
        %v1280 = vmul.f32 %v1279, %v392
        %v1281 = vmul.f32 %v1279, %v393
        %v1282 = vmul.f32 %v1279, %v394
        %v1283 = vadd.f32 %v1276, %v1280
        %v1284 = vadd.f32 %v1277, %v1281
        %v1285 = vadd.f32 %v1278, %v1282
        %1289 = vrot.lane.b32.xlu0 %v1283, 124
        %v1290 = vpop.permute.xlu0 %1289
        %1291 = vrot.lane.b32.xlu0 %v1284, 124
        %v1292 = vpop.permute.xlu0 %1291
        %1293 = vrot.lane.b32.xlu0 %v1285, 124
        %v1294 = vpop.permute.xlu0 %1293
        %v1298 = vadd.f32 %v1197, %v1290
        %v1299 = vadd.f32 %v1198, %v1292
        %v1300 = vadd.f32 %v1199, %v1294
        %v1301 = vstv %s420
        %v1302 = vmul.f32 %v1301, %v366
        %v1303 = vmul.f32 %v1301, %v367
        %v1304 = vmul.f32 %v1301, %v368
        %v1305 = vstv %s469
        %v1306 = vmul.f32 %v1305, %v392
        %v1307 = vmul.f32 %v1305, %v393
        %v1308 = vmul.f32 %v1305, %v394
        %v1309 = vadd.f32 %v1302, %v1306
        %v1310 = vadd.f32 %v1303, %v1307
        %v1311 = vadd.f32 %v1304, %v1308
        %1315 = vrot.lane.b32.xlu0 %v1309, 124
        %v1316 = vpop.permute.xlu0 %1315
        %1317 = vrot.lane.b32.xlu0 %v1310, 124
        %v1318 = vpop.permute.xlu0 %1317
        %1319 = vrot.lane.b32.xlu0 %v1311, 124
        %v1320 = vpop.permute.xlu0 %1319
        %v1324 = vadd.f32 %v1228, %v1316
        %v1325 = vadd.f32 %v1229, %v1318
        %v1326 = vadd.f32 %v1230, %v1320
        %v1327 = vstv %s427
        %v1328 = vmul.f32 %v1327, %v366
        %v1329 = vmul.f32 %v1327, %v367
        %v1330 = vmul.f32 %v1327, %v368
        %v1331 = vstv %s476
        %v1332 = vmul.f32 %v1331, %v392
        %v1333 = vmul.f32 %v1331, %v393
        %v1334 = vmul.f32 %v1331, %v394
        %v1335 = vadd.f32 %v1328, %v1332
        %v1336 = vadd.f32 %v1329, %v1333
        %v1337 = vadd.f32 %v1330, %v1334
        %v1341 = vrot.slane %v1335, 4
        %v1342 = vrot.slane %v1336, 4
        %v1343 = vsel %vm183, %v1341, %v1342
        %v1344 = vrot.slane %v1337, 4
        %v1345 = vsel %vm183, %v1342, %v1344
        %1346 = vrot.lane.b32.xlu0 %v1343, 124
        %v1347 = vpop.permute.xlu0 %1346
        %1348 = vrot.lane.b32.xlu0 %v1345, 124
        %v1349 = vpop.permute.xlu0 %1348
        %v1352 = vadd.f32 %v1247, %v1347
        %v1353 = vadd.f32 %v1248, %v1349
        %v1354 = vstv %s434
        %v1355 = vmul.f32 %v1354, %v366
        %v1356 = vmul.f32 %v1354, %v367
        %v1357 = vmul.f32 %v1354, %v368
        %v1358 = vstv %s483
        %v1359 = vmul.f32 %v1358, %v392
        %v1360 = vmul.f32 %v1358, %v393
        %v1361 = vmul.f32 %v1358, %v394
        %v1362 = vadd.f32 %v1355, %v1359
        %v1363 = vadd.f32 %v1356, %v1360
        %v1364 = vadd.f32 %v1357, %v1361
        %v1368 = vrot.slane %v1362, 4
        %v1369 = vrot.slane %v1363, 4
        %v1370 = vsel %vm183, %v1368, %v1369
        %v1371 = vrot.slane %v1364, 4
        %v1372 = vsel %vm183, %v1369, %v1371
        %1373 = vrot.lane.b32.xlu0 %v1370, 124
        %v1374 = vpop.permute.xlu0 %1373
        %1375 = vrot.lane.b32.xlu0 %v1372, 124
        %v1376 = vpop.permute.xlu0 %1375
        %1377 = vrot.lane.b32.xlu0 %v1371, 124
        %v1378 = vpop.permute.xlu0 %1377
        %v1382 = vadd.f32 %v1272, %v1374
        %v1383 = vadd.f32 %v1273, %v1376
        %v1384 = vadd.f32 %v1274, %v1378
        %v1385 = vstv %s441
        %v1386 = vmul.f32 %v1385, %v366
        %v1387 = vmul.f32 %v1385, %v367
        %v1388 = vmul.f32 %v1385, %v368
        %v1389 = vstv %s490
        %v1390 = vmul.f32 %v1389, %v392
        %v1391 = vmul.f32 %v1389, %v393
        %v1392 = vmul.f32 %v1389, %v394
        %v1393 = vadd.f32 %v1386, %v1390
        %v1394 = vadd.f32 %v1387, %v1391
        %v1395 = vadd.f32 %v1388, %v1392
        %v1399 = vrot.slane %v1393, 4
        %v1400 = vrot.slane %v1394, 4
        %v1401 = vsel %vm183, %v1399, %v1400
        %v1402 = vrot.slane %v1395, 4
        %v1403 = vsel %vm183, %v1400, %v1402
        %1404 = vrot.lane.b32.xlu0 %v1401, 124
        %v1405 = vpop.permute.xlu0 %1404
        %1406 = vrot.lane.b32.xlu0 %v1403, 124
        %v1407 = vpop.permute.xlu0 %1406
        %1408 = vrot.lane.b32.xlu0 %v1402, 124
        %v1409 = vpop.permute.xlu0 %1408
        %v1413 = vadd.f32 %v1298, %v1405
        %v1414 = vadd.f32 %v1299, %v1407
        %v1415 = vadd.f32 %v1300, %v1409
        %v1416 = vstv %s400
        %v1417 = vmul.f32 %v1416, %v366
        %v1418 = vmul.f32 %v1416, %v367
        %v1419 = vstv %s449
        %v1420 = vmul.f32 %v1419, %v392
        %v1421 = vmul.f32 %v1419, %v393
        %v1422 = vadd.f32 %v1417, %v1420
        %v1423 = vadd.f32 %v1418, %v1421
        %v1426 = vrot.slane %v1422, 5
        %v1427 = vrot.slane %v1423, 5
        %v1428 = vsel %vm267, %v1426, %v1427
        %1429 = vrot.lane.b32.xlu0 %v1426, 123
        %v1430 = vpop.permute.xlu0 %1429
        %1431 = vrot.lane.b32.xlu0 %v1428, 123
        %v1432 = vpop.permute.xlu0 %1431
        %1433 = vrot.lane.b32.xlu0 %v1427, 123
        %v1434 = vpop.permute.xlu0 %1433
        %v1438 = vadd.f32 %v1324, %v1430
        %v1439 = vadd.f32 %v1325, %v1432
        %v1440 = vadd.f32 %v1326, %v1434
        %v1441 = vstv %s407
        %v1442 = vmul.f32 %v1441, %v366
        %v1443 = vmul.f32 %v1441, %v367
        %v1444 = vmul.f32 %v1441, %v368
        %v1445 = vstv %s456
        %v1446 = vmul.f32 %v1445, %v392
        %v1447 = vmul.f32 %v1445, %v393
        %v1448 = vmul.f32 %v1445, %v394
        %v1449 = vadd.f32 %v1442, %v1446
        %v1450 = vadd.f32 %v1443, %v1447
        %v1451 = vadd.f32 %v1444, %v1448
        %v1455 = vrot.slane %v1449, 1
        %v1456 = vrot.slane %v1450, 1
        %v1457 = vsel %vm274, %v1455, %v1456
        %v1458 = vrot.slane %v1451, 1
        %v1459 = vsel %vm274, %v1456, %v1458
        %1460 = vrot.lane.b32.xlu0 %v1457, 123
        %v1461 = vpop.permute.xlu0 %1460
        %1462 = vrot.lane.b32.xlu0 %v1459, 123
        %v1463 = vpop.permute.xlu0 %1462
        %v1466 = vadd.f32 %v1352, %v1461
        %v1467 = vadd.f32 %v1353, %v1463
        %v1468 = vstv %s414
        %v1469 = vmul.f32 %v1468, %v366
        %v1470 = vmul.f32 %v1468, %v367
        %v1471 = vmul.f32 %v1468, %v368
        %v1472 = vstv %s463
        %v1473 = vmul.f32 %v1472, %v392
        %v1474 = vmul.f32 %v1472, %v393
        %v1475 = vmul.f32 %v1472, %v394
        %v1476 = vadd.f32 %v1469, %v1473
        %v1477 = vadd.f32 %v1470, %v1474
        %v1478 = vadd.f32 %v1471, %v1475
        %v1482 = vrot.slane %v1476, 1
        %v1483 = vrot.slane %v1477, 1
        %v1484 = vsel %vm274, %v1482, %v1483
        %v1485 = vrot.slane %v1478, 1
        %v1486 = vsel %vm274, %v1483, %v1485
        %1487 = vrot.lane.b32.xlu0 %v1484, 123
        %v1488 = vpop.permute.xlu0 %1487
        %1489 = vrot.lane.b32.xlu0 %v1486, 123
        %v1490 = vpop.permute.xlu0 %1489
        %1491 = vrot.lane.b32.xlu0 %v1485, 123
        %v1492 = vpop.permute.xlu0 %1491
        %v1496 = vadd.f32 %v1382, %v1488
        %v1497 = vadd.f32 %v1383, %v1490
        %v1498 = vadd.f32 %v1384, %v1492
        %v1499 = vstv %s421
        %v1500 = vmul.f32 %v1499, %v366
        %v1501 = vmul.f32 %v1499, %v367
        %v1502 = vmul.f32 %v1499, %v368
        %v1503 = vstv %s470
        %v1504 = vmul.f32 %v1503, %v392
        %v1505 = vmul.f32 %v1503, %v393
        %v1506 = vmul.f32 %v1503, %v394
        %v1507 = vadd.f32 %v1500, %v1504
        %v1508 = vadd.f32 %v1501, %v1505
        %v1509 = vadd.f32 %v1502, %v1506
        %v1513 = vrot.slane %v1507, 1
        %v1514 = vrot.slane %v1508, 1
        %v1515 = vsel %vm274, %v1513, %v1514
        %v1516 = vrot.slane %v1509, 1
        %v1517 = vsel %vm274, %v1514, %v1516
        %1518 = vrot.lane.b32.xlu0 %v1515, 123
        %v1519 = vpop.permute.xlu0 %1518
        %1520 = vrot.lane.b32.xlu0 %v1517, 123
        %v1521 = vpop.permute.xlu0 %1520
        %1522 = vrot.lane.b32.xlu0 %v1516, 123
        %v1523 = vpop.permute.xlu0 %1522
        %v1527 = vadd.f32 %v1413, %v1519
        %v1528 = vadd.f32 %v1414, %v1521
        %v1529 = vadd.f32 %v1415, %v1523
        %v1530 = vstv %s428
        %v1531 = vmul.f32 %v1530, %v366
        %v1532 = vmul.f32 %v1530, %v367
        %v1533 = vmul.f32 %v1530, %v368
        %v1534 = vstv %s477
        %v1535 = vmul.f32 %v1534, %v392
        %v1536 = vmul.f32 %v1534, %v393
        %v1537 = vmul.f32 %v1534, %v394
        %v1538 = vadd.f32 %v1531, %v1535
        %v1539 = vadd.f32 %v1532, %v1536
        %v1540 = vadd.f32 %v1533, %v1537
        %v1544 = vrot.slane %v1538, 1
        %v1545 = vrot.slane %v1539, 1
        %v1546 = vsel %vm274, %v1544, %v1545
        %v1547 = vrot.slane %v1540, 1
        %v1548 = vsel %vm274, %v1545, %v1547
        %1549 = vrot.lane.b32.xlu0 %v1546, 123
        %v1550 = vpop.permute.xlu0 %1549
        %1551 = vrot.lane.b32.xlu0 %v1548, 123
        %v1552 = vpop.permute.xlu0 %1551
        %1553 = vrot.lane.b32.xlu0 %v1547, 123
        %v1554 = vpop.permute.xlu0 %1553
        %v1558 = vadd.f32 %v1438, %v1550
        %v1559 = vadd.f32 %v1439, %v1552
        %v1560 = vadd.f32 %v1440, %v1554
        %v1561 = vstv %s435
        %v1562 = vmul.f32 %v1561, %v366
        %v1563 = vmul.f32 %v1561, %v367
        %v1564 = vmul.f32 %v1561, %v368
        %v1565 = vstv %s484
        %v1566 = vmul.f32 %v1565, %v392
        %v1567 = vmul.f32 %v1565, %v393
        %v1568 = vmul.f32 %v1565, %v394
        %v1569 = vadd.f32 %v1562, %v1566
        %v1570 = vadd.f32 %v1563, %v1567
        %v1571 = vadd.f32 %v1564, %v1568
        %v1575 = vrot.slane %v1569, 5
        %v1576 = vrot.slane %v1570, 5
        %v1577 = vsel %vm267, %v1575, %v1576
        %v1578 = vrot.slane %v1571, 5
        %v1579 = vsel %vm267, %v1576, %v1578
        %1580 = vrot.lane.b32.xlu0 %v1577, 123
        %v1581 = vpop.permute.xlu0 %1580
        %1582 = vrot.lane.b32.xlu0 %v1579, 123
        %v1583 = vpop.permute.xlu0 %1582
        %v1586 = vadd.f32 %v1466, %v1581
        %v1587 = vadd.f32 %v1467, %v1583
        %v1588 = vstv %s442
        %v1589 = vmul.f32 %v1588, %v366
        %v1590 = vmul.f32 %v1588, %v367
        %v1591 = vmul.f32 %v1588, %v368
        %v1592 = vstv %s491
        %v1593 = vmul.f32 %v1592, %v392
        %v1594 = vmul.f32 %v1592, %v393
        %v1595 = vmul.f32 %v1592, %v394
        %v1596 = vadd.f32 %v1589, %v1593
        %v1597 = vadd.f32 %v1590, %v1594
        %v1598 = vadd.f32 %v1591, %v1595
        %v1602 = vrot.slane %v1596, 5
        %v1603 = vrot.slane %v1597, 5
        %v1604 = vsel %vm267, %v1602, %v1603
        %v1605 = vrot.slane %v1598, 5
        %v1606 = vsel %vm267, %v1603, %v1605
        %1607 = vrot.lane.b32.xlu0 %v1604, 123
        %v1608 = vpop.permute.xlu0 %1607
        %1609 = vrot.lane.b32.xlu0 %v1606, 123
        %v1610 = vpop.permute.xlu0 %1609
        %1611 = vrot.lane.b32.xlu0 %v1605, 123
        %v1612 = vpop.permute.xlu0 %1611
        %v1616 = vadd.f32 %v1496, %v1608
        %v1617 = vadd.f32 %v1497, %v1610
        %v1618 = vadd.f32 %v1498, %v1612
        %v1619 = vstv %s401
        %v1620 = vmul.f32 %v1619, %v366
        %v1621 = vmul.f32 %v1619, %v367
        %v1622 = vstv %s450
        %v1623 = vmul.f32 %v1622, %v392
        %v1624 = vmul.f32 %v1622, %v393
        %v1625 = vadd.f32 %v1620, %v1623
        %v1626 = vadd.f32 %v1621, %v1624
        %v1629 = vrot.slane %v1625, 6
        %v1630 = vrot.slane %v1626, 6
        %v1631 = vsel %vm265, %v1629, %v1630
        %1632 = vrot.lane.b32.xlu0 %v1629, 122
        %v1633 = vpop.permute.xlu0 %1632
        %1634 = vrot.lane.b32.xlu0 %v1631, 122
        %v1635 = vpop.permute.xlu0 %1634
        %1636 = vrot.lane.b32.xlu0 %v1630, 122
        %v1637 = vpop.permute.xlu0 %1636
        %v1641 = vadd.f32 %v1527, %v1633
        %v1642 = vadd.f32 %v1528, %v1635
        %v1643 = vadd.f32 %v1529, %v1637
        %v1644 = vstv %s408
        %v1645 = vmul.f32 %v1644, %v366
        %v1646 = vmul.f32 %v1644, %v367
        %v1647 = vmul.f32 %v1644, %v368
        %v1648 = vstv %s457
        %v1649 = vmul.f32 %v1648, %v392
        %v1650 = vmul.f32 %v1648, %v393
        %v1651 = vmul.f32 %v1648, %v394
        %v1652 = vadd.f32 %v1645, %v1649
        %v1653 = vadd.f32 %v1646, %v1650
        %v1654 = vadd.f32 %v1647, %v1651
        %v1658 = vrot.slane %v1652, 6
        %v1659 = vrot.slane %v1653, 6
        %v1660 = vsel %vm265, %v1658, %v1659
        %v1661 = vrot.slane %v1654, 6
        %v1662 = vsel %vm265, %v1659, %v1661
        %1663 = vrot.lane.b32.xlu0 %v1658, 122
        %v1664 = vpop.permute.xlu0 %1663
        %1665 = vrot.lane.b32.xlu0 %v1660, 122
        %v1666 = vpop.permute.xlu0 %1665
        %1667 = vrot.lane.b32.xlu0 %v1662, 122
        %v1668 = vpop.permute.xlu0 %1667
        %v1672 = vadd.f32 %v1558, %v1664
        %v1673 = vadd.f32 %v1559, %v1666
        %v1674 = vadd.f32 %v1560, %v1668
        %v1675 = vstv %s415
        %v1676 = vmul.f32 %v1675, %v366
        %v1677 = vmul.f32 %v1675, %v367
        %v1678 = vmul.f32 %v1675, %v368
        %v1679 = vstv %s464
        %v1680 = vmul.f32 %v1679, %v392
        %v1681 = vmul.f32 %v1679, %v393
        %v1682 = vmul.f32 %v1679, %v394
        %v1683 = vadd.f32 %v1676, %v1680
        %v1684 = vadd.f32 %v1677, %v1681
        %v1685 = vadd.f32 %v1678, %v1682
        %v1689 = vrot.slane %v1683, 2
        %v1690 = vrot.slane %v1684, 2
        %v1691 = vsel %vm272, %v1689, %v1690
        %v1692 = vrot.slane %v1685, 2
        %v1693 = vsel %vm272, %v1690, %v1692
        %1694 = vrot.lane.b32.xlu0 %v1691, 122
        %v1695 = vpop.permute.xlu0 %1694
        %1696 = vrot.lane.b32.xlu0 %v1693, 122
        %v1697 = vpop.permute.xlu0 %1696
        %v1700 = vadd.f32 %v1586, %v1695
        %v1701 = vadd.f32 %v1587, %v1697
        %v1702 = vstv %s422
        %v1703 = vmul.f32 %v1702, %v366
        %v1704 = vmul.f32 %v1702, %v367
        %v1705 = vmul.f32 %v1702, %v368
        %v1706 = vstv %s471
        %v1707 = vmul.f32 %v1706, %v392
        %v1708 = vmul.f32 %v1706, %v393
        %v1709 = vmul.f32 %v1706, %v394
        %v1710 = vadd.f32 %v1703, %v1707
        %v1711 = vadd.f32 %v1704, %v1708
        %v1712 = vadd.f32 %v1705, %v1709
        %v1716 = vrot.slane %v1710, 2
        %v1717 = vrot.slane %v1711, 2
        %v1718 = vsel %vm272, %v1716, %v1717
        %v1719 = vrot.slane %v1712, 2
        %v1720 = vsel %vm272, %v1717, %v1719
        %1721 = vrot.lane.b32.xlu0 %v1718, 122
        %v1722 = vpop.permute.xlu0 %1721
        %1723 = vrot.lane.b32.xlu0 %v1720, 122
        %v1724 = vpop.permute.xlu0 %1723
        %1725 = vrot.lane.b32.xlu0 %v1719, 122
        %v1726 = vpop.permute.xlu0 %1725
        %v1730 = vadd.f32 %v1616, %v1722
        %v1731 = vadd.f32 %v1617, %v1724
        %v1732 = vadd.f32 %v1618, %v1726
        %v1733 = vstv %s429
        %v1734 = vmul.f32 %v1733, %v366
        %v1735 = vmul.f32 %v1733, %v367
        %v1736 = vmul.f32 %v1733, %v368
        %v1737 = vstv %s478
        %v1738 = vmul.f32 %v1737, %v392
        %v1739 = vmul.f32 %v1737, %v393
        %v1740 = vmul.f32 %v1737, %v394
        %v1741 = vadd.f32 %v1734, %v1738
        %v1742 = vadd.f32 %v1735, %v1739
        %v1743 = vadd.f32 %v1736, %v1740
        %v1747 = vrot.slane %v1741, 2
        %v1748 = vrot.slane %v1742, 2
        %v1749 = vsel %vm272, %v1747, %v1748
        %v1750 = vrot.slane %v1743, 2
        %v1751 = vsel %vm272, %v1748, %v1750
        %1752 = vrot.lane.b32.xlu0 %v1749, 122
        %v1753 = vpop.permute.xlu0 %1752
        %1754 = vrot.lane.b32.xlu0 %v1751, 122
        %v1755 = vpop.permute.xlu0 %1754
        %1756 = vrot.lane.b32.xlu0 %v1750, 122
        %v1757 = vpop.permute.xlu0 %1756
        %v1761 = vadd.f32 %v1641, %v1753
        %v1762 = vadd.f32 %v1642, %v1755
        %v1763 = vadd.f32 %v1643, %v1757
        %v1764 = vstv %s436
        %v1765 = vmul.f32 %v1764, %v366
        %v1766 = vmul.f32 %v1764, %v367
        %v1767 = vmul.f32 %v1764, %v368
        %v1768 = vstv %s485
        %v1769 = vmul.f32 %v1768, %v392
        %v1770 = vmul.f32 %v1768, %v393
        %v1771 = vmul.f32 %v1768, %v394
        %v1772 = vadd.f32 %v1765, %v1769
        %v1773 = vadd.f32 %v1766, %v1770
        %v1774 = vadd.f32 %v1767, %v1771
        %v1778 = vrot.slane %v1772, 2
        %v1779 = vrot.slane %v1773, 2
        %v1780 = vsel %vm272, %v1778, %v1779
        %v1781 = vrot.slane %v1774, 2
        %v1782 = vsel %vm272, %v1779, %v1781
        %1783 = vrot.lane.b32.xlu0 %v1780, 122
        %v1784 = vpop.permute.xlu0 %1783
        %1785 = vrot.lane.b32.xlu0 %v1782, 122
        %v1786 = vpop.permute.xlu0 %1785
        %1787 = vrot.lane.b32.xlu0 %v1781, 122
        %v1788 = vpop.permute.xlu0 %1787
        %v1792 = vadd.f32 %v1672, %v1784
        %v1793 = vadd.f32 %v1673, %v1786
        %v1794 = vadd.f32 %v1674, %v1788
        %v1795 = vstv %s443
        %v1796 = vmul.f32 %v1795, %v366
        %v1797 = vmul.f32 %v1795, %v367
        %v1798 = vmul.f32 %v1795, %v368
        %v1799 = vstv %s492
        %v1800 = vmul.f32 %v1799, %v392
        %v1801 = vmul.f32 %v1799, %v393
        %v1802 = vmul.f32 %v1799, %v394
        %v1803 = vadd.f32 %v1796, %v1800
        %v1804 = vadd.f32 %v1797, %v1801
        %v1805 = vadd.f32 %v1798, %v1802
        %v1809 = vrot.slane %v1803, 6
        %v1810 = vrot.slane %v1804, 6
        %v1811 = vsel %vm265, %v1809, %v1810
        %v1812 = vrot.slane %v1805, 6
        %v1813 = vsel %vm265, %v1810, %v1812
        %1814 = vrot.lane.b32.xlu0 %v1811, 122
        %v1815 = vpop.permute.xlu0 %1814
        %1816 = vrot.lane.b32.xlu0 %v1813, 122
        %v1817 = vpop.permute.xlu0 %1816
        %v1820 = vadd.f32 %v1700, %v1815
        %v1821 = vadd.f32 %v1701, %v1817
        %v1825 = vrot.slane %v1730, 1
        %v1826 = vrot.slane %v1731, 1
        %v1827 = vsel %vm274, %v1825, %v1826
        %v1828 = vrot.slane %v1732, 1
        %v1829 = vsel %vm274, %v1826, %v1828
        %v1832 = vadd.f32 %v1820, %v1827
        %v1833 = vadd.f32 %v1821, %v1829
        %v1837 = vrot.slane %v1792, 1
        %v1838 = vrot.slane %v1793, 1
        %v1839 = vsel %vm274, %v1837, %v1838
        %v1840 = vrot.slane %v1794, 1
        %v1841 = vsel %vm274, %v1838, %v1840
        %v1845 = vadd.f32 %v1761, %v1839
        %v1846 = vadd.f32 %v1762, %v1841
        %v1847 = vadd.f32 %v1763, %v1840
        %v1851 = vrot.slane %v1845, 2
        %v1852 = vrot.slane %v1846, 2
        %v1853 = vsel %vm272, %v1851, %v1852
        %v1854 = vrot.slane %v1847, 2
        %v1855 = vsel %vm272, %v1852, %v1854
        %v1858 = vadd.f32 %v1832, %v1853
        %v1859 = vadd.f32 %v1833, %v1855
        %v1860 = vxor.u32 %v1858, 2147483648
        %v1861 = vxor.u32 %v1859, 2147483648
        %v1862 = vmul.f32 %v1860, 1.442695
        %v1863 = vpow.pop %v1862
        %v1864 = vmul.f32 %v1861, 1.442695
        %v1865 = vpow.pop %v1864
        %v1866 = vadd.f32 %v1863, 1.0
        %v1867 = vadd.f32 %v1865, 1.0
        %v1868 = vrcp.pop %v1866
        %v1869 = vmul.f32 %v1866, %v1868
        %v1870 = vsub.f32 1.0, %v1869
        %v1871 = vmul.f32 %v1868, %v1870
        %v1872 = vadd.f32 %v1868, %v1871
        %vm1873 = vweird.f32 %v1866
        %vm1874 = vweird.f32 %v1868
        %vm1875 = vmor %vm1873, %vm1874
        %v1876 = vsel %vm1875, %v1868, %v1872
        %v1877 = vand.u32 2147483647, %v1866
        %vm1878 = vcmp.eq.f32.partialorder %v1877, 8.507059e+37
        %v1879 = vand.u32 %v1866, 2147483648
        %v1880 = vor.u32 1.1754944e-38, %v1879
        %v1881 = vsel %vm1878, %v1880, %v1876
        %v1882 = vmul.f32 1.0, %v1881
        %v1883 = vrcp.pop %v1867
        %v1884 = vmul.f32 %v1867, %v1883
        %v1885 = vsub.f32 1.0, %v1884
        %v1886 = vmul.f32 %v1883, %v1885
        %v1887 = vadd.f32 %v1883, %v1886
        %vm1888 = vweird.f32 %v1867
        %vm1889 = vweird.f32 %v1883
        %vm1890 = vmor %vm1888, %vm1889
        %v1891 = vsel %vm1890, %v1883, %v1887
        %v1892 = vand.u32 2147483647, %v1867
        %vm1893 = vcmp.eq.f32.partialorder %v1892, 8.507059e+37
        %v1894 = vand.u32 %v1867, 2147483648
        %v1895 = vor.u32 1.1754944e-38, %v1894
        %v1896 = vsel %vm1893, %v1895, %v1891
        %v1897 = vmul.f32 1.0, %v1896
        %v1899 = vrot.slane %v1882, 1
        %1900 = vrot.lane.b32.xlu0 %v1899, 16
        %v1901 = vpop.permute.xlu0 %1900
        %v1903 = vrot.slane %v1882, 2
        %1904 = vrot.lane.b32.xlu0 %v1903, 32
        %v1905 = vpop.permute.xlu0 %1904
        %v1907 = vrot.slane %v1882, 3
        %1908 = vrot.lane.b32.xlu0 %v1907, 48
        %v1909 = vpop.permute.xlu0 %1908
        %v1911 = vrot.slane %v1882, 4
        %1912 = vrot.lane.b32.xlu0 %v1911, 64
        %v1913 = vpop.permute.xlu0 %1912
        %v1915 = vrot.slane %v1882, 5
        %1916 = vrot.lane.b32.xlu0 %v1915, 80
        %v1917 = vpop.permute.xlu0 %1916
        %v1919 = vrot.slane %v1882, 6
        %1920 = vrot.lane.b32.xlu0 %v1919, 96
        %v1921 = vpop.permute.xlu0 %1920
        %v1923 = vrot.slane %v1882, 7
        %1924 = vrot.lane.b32.xlu0 %v1923, 112
        %v1925 = vpop.permute.xlu0 %1924
        %v1928 = vrot.slane %v1897, 1
        %1929 = vrot.lane.b32.xlu0 %v1928, 16
        %v1930 = vpop.permute.xlu0 %1929
        %v1932 = vrot.slane %v1897, 2
        %1933 = vrot.lane.b32.xlu0 %v1932, 32
        %v1934 = vpop.permute.xlu0 %1933
        %v1936 = vrot.slane %v1897, 3
        %1937 = vrot.lane.b32.xlu0 %v1936, 48
        %v1938 = vpop.permute.xlu0 %1937
        %v1940 = vrot.slane %v1897, 4
        %1941 = vrot.lane.b32.xlu0 %v1940, 64
        %v1942 = vpop.permute.xlu0 %1941
        %v1944 = vrot.slane %v1897, 5
        %1945 = vrot.lane.b32.xlu0 %v1944, 80
        %v1946 = vpop.permute.xlu0 %1945
        %v1948 = vrot.slane %v1897, 6
        %1949 = vrot.lane.b32.xlu0 %v1948, 96
        %v1950 = vpop.permute.xlu0 %1949
        %v1952 = vrot.slane %v1897, 7
        %1953 = vrot.lane.b32.xlu0 %v1952, 112
        %v1954 = vpop.permute.xlu0 %1953
        %vm1956 = vcmask 130048
        %v1957 = vsel %vm1956, %v1882, %v1901
        %vm1958 = vcmask 261120
        %v1959 = vsel %vm1958, %v1957, %v1905
        %vm1960 = vcmask 392192
        %v1961 = vsel %vm1960, %v1959, %v1909
        %vm1962 = vcmask 523264
        %v1963 = vsel %vm1962, %v1961, %v1913
        %vm1964 = vcmask 654336
        %v1965 = vsel %vm1964, %v1963, %v1917
        %vm1966 = vcmask 785408
        %v1967 = vsel %vm1966, %v1965, %v1921
        %vm1968 = vcmask 916480
        %v1969 = vsel %vm1968, %v1967, %v1925
        %v1970 = vsel %vm1956, %v1897, %v1930
        %v1971 = vsel %vm1958, %v1970, %v1934
        %v1972 = vsel %vm1960, %v1971, %v1938
        %v1973 = vsel %vm1962, %v1972, %v1942
        %v1974 = vsel %vm1964, %v1973, %v1946
        %v1975 = vsel %vm1966, %v1974, %v1950
        %v1976 = vsel %vm1968, %v1975, %v1954
        %v1977 = vperm.slane %v1969, 0
        %v1978 = vperm.slane %v1976, 0
        %v1981 = vrot.slane %v1978, 4
        %v1982 = vsel %vm183, %v1977, %v1981
        %v1984 = vmul.f32 %v176, %v1982
        %1985 = vst [vmem:[%s175] sm:$0xff] %v1984
        %s1986 = sand.u32 %s75, 1
        %s1987 = scalar_lea.sflag [#allocation4], %s1986
        %s1988 = sand.u32 %s75, 1
        %s1989 = smul.addr %s1988, 8
        %s1990 = scalar_lea.vmem [#allocation7], %s1989
        // Predicated region
        $region37: #{tpu_custom_call.1} parent=27 // pred_check
          %p1991 = pneg %p85
        $region38: #{tpu_custom_call.1} parent=27 // pred_check_branch
          %1993 = sbr.rel (%p1991) target = $region40
        $region39: #{tpu_custom_call.1} parent=27 // pred_region
          %1995 = vsyncadd %s1987, 0
          %s1996 = smul.addr %s20, 2
          %s1997 = smul.addr %s1996, 4
          %s1998 = scalar_lea.hbm %s2, %s1997
          %s2000 = sshll.u32 %s1990, 4
          %s2001 = int_to_ptr.vmem [resolvable:$true] %s2000
          %s2002 = sshll.u32 %s1998, 4
          %s2003 = int_to_ptr.hbm [resolvable:$true] %s2002
          %2005 = dma.vmem_to_hbm [thread:$0]  %s2001, 128, %s2003, %s1987
        $region40: #{tpu_custom_call.1} parent=27 // pred_fallthru
          _
      $region28: #{tpu_custom_call.1} parent=5 // pred_fallthru
        _
      %p2006 = scmp.le.s32.totalorder 2, %s15
      // Predicated region
      $region41: #{tpu_custom_call.1} parent=5 // pred_check
        %p2007 = pneg %p2006
      $region42: #{tpu_custom_call.1} parent=5 // pred_check_branch
        %2009 = sbr.rel (%p2007) target = $region44
      $region43: #{tpu_custom_call.1} parent=5 // pred_region
        %s2010 = ssub.s32 %s15, 2
        // Predicated region
        $region45: #{tpu_custom_call.1} parent=43 // pred_check
          %p2011 = pneg %p91
        $region46: #{tpu_custom_call.1} parent=43 // pred_check_branch
          %2013 = sbr.rel (%p2011) target = $region48
        $region47: #{tpu_custom_call.1} parent=43 // pred_region
          %s2014 = sand.u32 %s76, 1
          %s2015 = scalar_lea.sflag [#allocation4], %s2014
          %s2016 = sand.u32 %s76, 1
          %s2017 = smul.addr %s2016, 8
          %s2018 = scalar_lea.vmem [#allocation7], %s2017
          %2020 = dma.done %s2015, 128
        $region48: #{tpu_custom_call.1} parent=43 // pred_fallthru
          _
      $region44: #{tpu_custom_call.1} parent=5 // pred_fallthru
        _
    $region6: #{tpu_custom_call.1} parent=1 // loop_footer
      %s19 = sadd.s32 1, %s15
    $region7: #{tpu_custom_call.1} parent=1 // loop_footer_branch
      %14 = sbr.rel target = $region3
    $region8: #{tpu_custom_call.1} parent=1 // loop_exit
      _
    %2021 = vsyncpa [#allocation3], 1
    %s2022 = scalar_lea.sflag [#allocation3], 1
    %2023 = vsyncpa %s2022, 1
    %2024 = vsyncpa [#allocation4], 1
    %s2025 = scalar_lea.sflag [#allocation4], 1
    %2026 = vsyncpa %s2025, 1
    %2027 = vsyncpa [#allocation5], 1
    %s2028 = scalar_lea.sflag [#allocation5], 1
    %2029 = vsyncpa %s2028, 1

</llo_original>
